<compile_context>
chip_gen: v5e
topology: v5e:2x2
jax: 0.10.0
libtpu: 0.0.40
codegen_flags: <defaults>
</compile_context>

<pallas_src>
import functools
from typing import NamedTuple

import jax
import jax.numpy as jnp
from jax.experimental import pallas as pl
from jax.experimental.pallas import tpu as pltpu


class LayerPlan(NamedTuple):
    latent: bool      # concat the original input again at this layer (split-K)
    r_total: int      # SVD rank (+ folded residual rank)
    out_dim: int
    relu: bool
    tanh: bool


# ------------------------------ fused kernel ------------------------------- #

def _fused_dict_kernel(*refs, plan):
    """Whole Dict_acc MLP for one (shape b, point-tile t) grid step.

    refs = (sigma_ref, x_ref, <per-layer weight refs...>, o_ref)
      sigma_ref : (1, sigma_dim, L) raw Sigma of shape b (feature-major)
      x_ref     : (d_in, T) bf16 — T points of shape b on the lane axis
      per layer : vt (r_tot, in)  [vt_a, vt_b split for latent_in layers],
                  u  (out, r_tot), bias (out, 1)
      o_ref     : (out_final, T) f32
    """
    o_ref = refs[-1]
    sigma_ref, x_ref = refs[0], refs[1]
    it = iter(refs[2:-1])

    sig_all = sigma_ref[...][0]                 # (sigma_dim, L) f32, loaded once
    x_in = x_ref[...]                           # (d_in, T) bf16 — kept resident
    x = x_in

    for i, lp in enumerate(plan):
        xb = x.astype(jnp.bfloat16)
        if lp.latent:
            # split-K matmul instead of concat([x, x_input], feature axis)
            vt_a = next(it)[...]                # (r_tot, x_width) bf16
            vt_b = next(it)[...]                # (r_tot, d_in)    bf16
            x1 = (jnp.dot(vt_a, xb, preferred_element_type=jnp.float32)
                  + jnp.dot(vt_b, x_in, preferred_element_type=jnp.float32))
        else:
            vt = next(it)[...]                  # (r_tot, x_width) bf16
            x1 = jnp.dot(vt, xb, preferred_element_type=jnp.float32)

        # Per-shape sigma column, exp'd on the EUP, broadcast across lanes.
        sig = jnp.exp(sig_all[:lp.r_total, i:i + 1])            # (r_tot, 1) f32

        u = next(it)[...]                       # (out, r_tot) bf16
        b = next(it)[...]                       # (out, 1)     f32
        y = jnp.dot(u, (x1 * sig).astype(jnp.bfloat16),
                    preferred_element_type=jnp.float32) + b     # (out, T) f32

        if lp.relu:
            y = jnp.maximum(y, 0.0)
        if lp.tanh:
            y = jnp.tanh(y)
        x = y

    o_ref[...] = x


# --------------------------- one-time weight prep --------------------------- #

def prepare_dict_acc(params, *, half, rank, latent_in, d_in):
    """Hoisted, call-invariant prep: residual fold, latent split, bf16 casts.

    params: dict with lists U[i] (out, r), Vt[i] (r, in), bias[i] (out,),
            res_vt[j] (rank, in), res_u[j] (out, rank)  (PyTorch layouts).
    Returns (weight_args, plan).
    """
    num_layers = len(params["U"])
    args, plan = [], []
    x_width = d_in
    for i in range(num_layers):
        vt = jnp.asarray(params["Vt"][i], jnp.float32)        # (r, in)
        u = jnp.asarray(params["U"][i], jnp.float32)          # (out, r)
        b = jnp.asarray(params["bias"][i], jnp.float32)       # (out,)
        is_latent = i in latent_in
        has_res = (i >= half) and bool(rank)
        if has_res:
            j = i - half
            # Fold the low-rank residual branch into the main matmuls.
            vt = jnp.concatenate([vt, jnp.asarray(params["res_vt"][j], jnp.float32)], 0)
            u = jnp.concatenate([u, jnp.asarray(params["res_u"][j], jnp.float32)], 1)
        r_total, in_dim = vt.shape
        out_dim = u.shape[0]
        vt = vt.astype(jnp.bfloat16)
        if is_latent:
            assert in_dim == x_width + d_in
            args += [vt[:, :x_width], vt[:, x_width:]]         # acts on x / x_input
        else:
            assert in_dim == x_width
            args.append(vt)
        args.append(u.astype(jnp.bfloat16))
        args.append(b.reshape(out_dim, 1))                     # f32 bias column
        plan.append(LayerPlan(latent=is_latent, r_total=r_total, out_dim=out_dim,
                              relu=(i < num_layers - 1), tanh=(i == num_layers - 1)))
        x_width = out_dim
    return tuple(args), tuple(plan)


# --------------------------------- forward ---------------------------------- #

def _pick_tile(points_per_shape):
    for t in (512, 256, 128):
        if points_per_shape % t == 0:
            return t
    raise ValueError("points-per-shape must be a multiple of 128")


@functools.partial(jax.jit, static_argnames=("plan", "bs", "tile_p"))
def dict_acc_forward(weight_args, x_input, Sigma, *, plan, bs, tile_p=None):
    """Fused Dict_acc forward.  x_input: (N, d_in) with each shape's P points
    contiguous; Sigma: (bs, num_layers, sigma_dim).  Returns (N, out_final)."""
    N, d_in = x_input.shape
    num_layers = len(plan)
    out_final = plan[-1].out_dim
    sigma_dim = Sigma.shape[-1]
    assert Sigma.shape[0] == bs and Sigma.shape[1] == num_layers
    assert N % bs == 0, "each shape must contribute the same number of points"
    P = N // bs
    # TODO(synk): pad the point axis when P is not a multiple of 128.
    assert P % 128 == 0, "points-per-shape must be a multiple of 128"
    tp = tile_p or _pick_tile(P)
    tiles = P // tp

    # Per-call layout plumbing only: lane-dense (feature-major) x and Sigma.
    x_t = x_input.T.astype(jnp.bfloat16)                       # (d_in, N)
    sig_t = jnp.swapaxes(Sigma.astype(jnp.float32), 1, 2)      # (bs, sigma_dim, L)

    # x/out tiled over (shape, point-tile); weights whole-array with constant
    # index_map (fetched once, no per-step re-DMA); sigma is a tiny per-shape block.
    in_specs = [
        pl.BlockSpec((1, sigma_dim, num_layers), lambda b, t: (b, 0, 0)),
        pl.BlockSpec((d_in, tp), lambda b, t: (0, b * tiles + t)),
    ]
    in_specs += [pl.BlockSpec(w.shape, lambda b, t: (0, 0)) for w in weight_args]
    out_spec = pl.BlockSpec((out_final, tp), lambda b, t: (0, b * tiles + t))

    # Advisory cost estimate so XLA schedules the tiny custom call sensibly.
    flops, x_w = 0, d_in
    for lp in plan:
        k_in = x_w + (d_in if lp.latent else 0)
        flops += 2 * N * (k_in * lp.r_total + lp.r_total * lp.out_dim)
        x_w = lp.out_dim
    transcendentals = N * out_final + bs * tiles * sum(lp.r_total for lp in plan)
    bytes_accessed = (x_t.size * x_t.dtype.itemsize + sig_t.size * 4
                      + sum(w.size * w.dtype.itemsize for w in weight_args)
                      + N * out_final * 4)

    kern = functools.partial(_fused_dict_kernel, plan=plan)
    out_t = pl.pallas_call(
        kern,
        out_shape=jax.ShapeDtypeStruct((out_final, N), jnp.float32),
        grid=(bs, tiles),
        in_specs=in_specs,
        out_specs=out_spec,
        # Working set is a few hundred KiB — default scoped-VMEM limits suffice;
        # both grid axes are embarrassingly parallel (v7x uses both TensorCores).
        compiler_params=pltpu.CompilerParams(
            dimension_semantics=("parallel", "parallel")),
        cost_estimate=pl.CostEstimate(flops=flops,
                                      transcendentals=transcendentals,
                                      bytes_accessed=bytes_accessed),
    )(sig_t, x_t, *weight_args)
    return out_t.T                                             # (N, out_final)


# ----------------------- pure-JAX reference (check) ------------------------ #

def dict_acc_ref(params, x_input, Sigma, bs, half, rank, latent_in):
    x = x_input
    N = x_input.shape[0]
    P = N // bs
    num_layers = len(params["U"])
    for i in range(num_layers):
        if i in latent_in:
            x = jnp.concatenate([x, x_input], axis=1)
        vt_w, u_w, u_b = params["Vt"][i], params["U"][i], params["bias"][i]
        r = vt_w.shape[0]
        x1 = x @ vt_w.T
        x1 = x1 * jnp.repeat(jnp.exp(Sigma[:, i, :r]), P, axis=0)
        x1 = x1 @ u_w.T + u_b
        if i >= half and rank:
            j = i - half
            x2 = x @ params["res_vt"][j].T
            x2 = x2 * jnp.repeat(jnp.exp(Sigma[:, i, r:r + rank]), P, axis=0)
            x2 = x2 @ params["res_u"][j].T
            x = x1 + x2
        else:
            x = x1
        if i < num_layers - 1:
            x = jax.nn.relu(x)
    return jnp.tanh(x)


# ------------------------------ params ------------------------------------- #

def init_params(key, layer_dims, half, rank):
    U, Vt, bias, res_u, res_vt = [], [], [], [], []
    for i, (din, r, dout) in enumerate(layer_dims):
        key, k1, k2, k3 = jax.random.split(key, 4)
        Vt.append(0.1 * jax.random.normal(k1, (r, din), jnp.float32))
        U.append(0.1 * jax.random.normal(k2, (dout, r), jnp.float32))
        bias.append(0.1 * jax.random.normal(k3, (dout,), jnp.float32))
        if i >= half and rank:
            key, k4, k5 = jax.random.split(key, 3)
            res_vt.append(0.001 * jax.random.normal(k4, (rank, din), jnp.float32))
            res_u.append(0.001 * jax.random.normal(k5, (dout, rank), jnp.float32))
    return dict(U=U, Vt=Vt, bias=bias, res_u=res_u, res_vt=res_vt)


# -------------------------------- main -------------------------------------- #

if __name__ == "__main__":
    bs, P = 2, 128                # 2 shapes, 128 query points each (lane-dense)
    N = bs * P
    D_in = 16                     # latent(13) + xyz(3)
    half, rank = 3, 4             # low-rank residual for layers i >= 3
    latent_in = (4,)              # concat input again at layer 4
    # (in_dim, svd_rank ori_len, out_dim) per layer; final width 8 is synthetic
    layer_dims = [(16, 16, 32), (32, 16, 32), (32, 16, 32),
                  (32, 16, 32), (48, 16, 32), (32, 16, 8)]
    sigma_dim = 16 + rank

    key = jax.random.PRNGKey(0)
    kp, kx, ks = jax.random.split(key, 3)
    params = init_params(kp, layer_dims, half, rank)
    x = jax.random.normal(kx, (N, D_in), jnp.float32)
    Sigma = 0.1 * jax.random.normal(ks, (bs, len(layer_dims), sigma_dim), jnp.float32)

    # One-time prep, hoisted out of the per-call forward.
    weight_args, plan = prepare_dict_acc(params, half=half, rank=rank,
                                         latent_in=latent_in, d_in=D_in)

    out = dict_acc_forward(weight_args, x, Sigma, plan=plan, bs=bs)
    out = jax.block_until_ready(out)

    ref = dict_acc_ref(params, x, Sigma, bs, half, rank, latent_in)
    err = float(jnp.max(jnp.abs(out - ref)))
    assert out.shape == (N, layer_dims[-1][2]), out.shape
    # bf16 MXU operands vs f32 reference -> relaxed tolerance.
    assert err < 3e-2, f"mismatch vs reference: max abs err = {err}"
    print("KERNEL_OK")
</pallas_src>

<mosaic_0001>
module attributes {stable_mosaic.version = 11 : i64} {
  func.func @_fused_dict_kernel(%arg0: i32, %arg1: i32, %arg2: memref<1x20x6xf32, #tpu.memory_space<vmem>>, %arg3: memref<16x128xbf16, #tpu.memory_space<vmem>>, %arg4: memref<16x16xbf16, #tpu.memory_space<vmem>>, %arg5: memref<32x16xbf16, #tpu.memory_space<vmem>>, %arg6: memref<32x1xf32, #tpu.memory_space<vmem>>, %arg7: memref<16x32xbf16, #tpu.memory_space<vmem>>, %arg8: memref<32x16xbf16, #tpu.memory_space<vmem>>, %arg9: memref<32x1xf32, #tpu.memory_space<vmem>>, %arg10: memref<16x32xbf16, #tpu.memory_space<vmem>>, %arg11: memref<32x16xbf16, #tpu.memory_space<vmem>>, %arg12: memref<32x1xf32, #tpu.memory_space<vmem>>, %arg13: memref<20x32xbf16, #tpu.memory_space<vmem>>, %arg14: memref<32x20xbf16, #tpu.memory_space<vmem>>, %arg15: memref<32x1xf32, #tpu.memory_space<vmem>>, %arg16: memref<20x32xbf16, #tpu.memory_space<vmem>>, %arg17: memref<20x16xbf16, #tpu.memory_space<vmem>>, %arg18: memref<32x20xbf16, #tpu.memory_space<vmem>>, %arg19: memref<32x1xf32, #tpu.memory_space<vmem>>, %arg20: memref<20x32xbf16, #tpu.memory_space<vmem>>, %arg21: memref<8x20xbf16, #tpu.memory_space<vmem>>, %arg22: memref<8x1xf32, #tpu.memory_space<vmem>>, %arg23: memref<8x128xf32, #tpu.memory_space<vmem>>) attributes {dimension_semantics = [#tpu.dimension_semantics<parallel>, #tpu.dimension_semantics<parallel>], iteration_bounds = array<i64: 2, 1>, scalar_prefetch = 0 : i64, scratch_operands = 0 : i64, tpu.core_type = #tpu.core_type<tc>, window_params = [{transform_indices = @transform_0, window_bounds = array<i64: 1, 20, 6>}, {transform_indices = @transform_1, window_bounds = array<i64: 16, 128>}, {pipeline_mode = #tpu.pipeline_mode<synchronous>, transform_indices = @transform_2, window_bounds = array<i64: 16, 16>}, {pipeline_mode = #tpu.pipeline_mode<synchronous>, transform_indices = @transform_3, window_bounds = array<i64: 32, 16>}, {pipeline_mode = #tpu.pipeline_mode<synchronous>, transform_indices = @transform_4, window_bounds = array<i64: 32, 1>}, {pipeline_mode = #tpu.pipeline_mode<synchronous>, transform_indices = @transform_5, window_bounds = array<i64: 16, 32>}, {pipeline_mode = #tpu.pipeline_mode<synchronous>, transform_indices = @transform_6, window_bounds = array<i64: 32, 16>}, {pipeline_mode = #tpu.pipeline_mode<synchronous>, transform_indices = @transform_7, window_bounds = array<i64: 32, 1>}, {pipeline_mode = #tpu.pipeline_mode<synchronous>, transform_indices = @transform_8, window_bounds = array<i64: 16, 32>}, {pipeline_mode = #tpu.pipeline_mode<synchronous>, transform_indices = @transform_9, window_bounds = array<i64: 32, 16>}, {pipeline_mode = #tpu.pipeline_mode<synchronous>, transform_indices = @transform_10, window_bounds = array<i64: 32, 1>}, {pipeline_mode = #tpu.pipeline_mode<synchronous>, transform_indices = @transform_11, window_bounds = array<i64: 20, 32>}, {pipeline_mode = #tpu.pipeline_mode<synchronous>, transform_indices = @transform_12, window_bounds = array<i64: 32, 20>}, {pipeline_mode = #tpu.pipeline_mode<synchronous>, transform_indices = @transform_13, window_bounds = array<i64: 32, 1>}, {pipeline_mode = #tpu.pipeline_mode<synchronous>, transform_indices = @transform_14, window_bounds = array<i64: 20, 32>}, {pipeline_mode = #tpu.pipeline_mode<synchronous>, transform_indices = @transform_15, window_bounds = array<i64: 20, 16>}, {pipeline_mode = #tpu.pipeline_mode<synchronous>, transform_indices = @transform_16, window_bounds = array<i64: 32, 20>}, {pipeline_mode = #tpu.pipeline_mode<synchronous>, transform_indices = @transform_17, window_bounds = array<i64: 32, 1>}, {pipeline_mode = #tpu.pipeline_mode<synchronous>, transform_indices = @transform_18, window_bounds = array<i64: 20, 32>}, {pipeline_mode = #tpu.pipeline_mode<synchronous>, transform_indices = @transform_19, window_bounds = array<i64: 8, 20>}, {pipeline_mode = #tpu.pipeline_mode<synchronous>, transform_indices = @transform_20, window_bounds = array<i64: 8, 1>}, {transform_indices = @transform_21, window_bounds = array<i64: 8, 128>}]} {
    %c0 = arith.constant 0 : index
    %c0_0 = arith.constant 0 : index
    %c0_1 = arith.constant 0 : index
    %0 = vector.load %arg2[%c0, %c0_0, %c0_1] : memref<1x20x6xf32, #tpu.memory_space<vmem>>, vector<1x20x6xf32>
    %1 = vector.shape_cast %0 : vector<1x20x6xf32> to vector<20x6xf32>
    %c0_2 = arith.constant 0 : index
    %c0_3 = arith.constant 0 : index
    %2 = vector.load %arg3[%c0_2, %c0_3] : memref<16x128xbf16, #tpu.memory_space<vmem>>, vector<16x128xbf16>
    %c0_4 = arith.constant 0 : index
    %c0_5 = arith.constant 0 : index
    %3 = vector.load %arg4[%c0_4, %c0_5] : memref<16x16xbf16, #tpu.memory_space<vmem>>, vector<16x16xbf16>
    %cst = arith.constant dense<0.000000e+00> : vector<16x128xf32>
    %4 = tpu.matmul %3, %2, %cst {dimension_numbers = #tpu.dot_dimension_numbers<[1], [0], [0], [1], [0, 0, 1, 1], [], []>} : vector<16x16xbf16>, vector<16x128xbf16>, vector<16x128xf32> -> vector<16x128xf32>
    %5 = vector.extract_strided_slice %1 {offsets = [0, 0], sizes = [16, 1], strides = [1, 1]} : vector<20x6xf32> to vector<16x1xf32>
    %6 = math.exp %5 : vector<16x1xf32>
    %c0_6 = arith.constant 0 : index
    %c0_7 = arith.constant 0 : index
    %7 = vector.load %arg5[%c0_6, %c0_7] : memref<32x16xbf16, #tpu.memory_space<vmem>>, vector<32x16xbf16>
    %c0_8 = arith.constant 0 : index
    %c0_9 = arith.constant 0 : index
    %8 = vector.load %arg6[%c0_8, %c0_9] : memref<32x1xf32, #tpu.memory_space<vmem>>, vector<32x1xf32>
    %9 = vector.broadcast %6 : vector<16x1xf32> to vector<16x128xf32>
    %10 = arith.mulf %4, %9 : vector<16x128xf32>
    %11 = arith.truncf %10 : vector<16x128xf32> to vector<16x128xbf16>
    %cst_10 = arith.constant dense<0.000000e+00> : vector<32x128xf32>
    %12 = tpu.matmul %7, %11, %cst_10 {dimension_numbers = #tpu.dot_dimension_numbers<[1], [0], [0], [1], [0, 0, 1, 1], [], []>} : vector<32x16xbf16>, vector<16x128xbf16>, vector<32x128xf32> -> vector<32x128xf32>
    %13 = vector.broadcast %8 : vector<32x1xf32> to vector<32x128xf32>
    %14 = arith.addf %12, %13 : vector<32x128xf32>
    %cst_11 = arith.constant 0.000000e+00 : f32
    %15 = vector.broadcast %cst_11 : f32 to vector<32x128xf32>
    %16 = arith.maximumf %14, %15 : vector<32x128xf32>
    %17 = arith.truncf %16 : vector<32x128xf32> to vector<32x128xbf16>
    %c0_12 = arith.constant 0 : index
    %c0_13 = arith.constant 0 : index
    %18 = vector.load %arg7[%c0_12, %c0_13] : memref<16x32xbf16, #tpu.memory_space<vmem>>, vector<16x32xbf16>
    %cst_14 = arith.constant dense<0.000000e+00> : vector<16x128xf32>
    %19 = tpu.matmul %18, %17, %cst_14 {dimension_numbers = #tpu.dot_dimension_numbers<[1], [0], [0], [1], [0, 0, 1, 1], [], []>} : vector<16x32xbf16>, vector<32x128xbf16>, vector<16x128xf32> -> vector<16x128xf32>
    %20 = vector.extract_strided_slice %1 {offsets = [0, 1], sizes = [16, 1], strides = [1, 1]} : vector<20x6xf32> to vector<16x1xf32>
    %21 = math.exp %20 : vector<16x1xf32>
    %c0_15 = arith.constant 0 : index
    %c0_16 = arith.constant 0 : index
    %22 = vector.load %arg8[%c0_15, %c0_16] : memref<32x16xbf16, #tpu.memory_space<vmem>>, vector<32x16xbf16>
    %c0_17 = arith.constant 0 : index
    %c0_18 = arith.constant 0 : index
    %23 = vector.load %arg9[%c0_17, %c0_18] : memref<32x1xf32, #tpu.memory_space<vmem>>, vector<32x1xf32>
    %24 = vector.broadcast %21 : vector<16x1xf32> to vector<16x128xf32>
    %25 = arith.mulf %19, %24 : vector<16x128xf32>
    %26 = arith.truncf %25 : vector<16x128xf32> to vector<16x128xbf16>
    %cst_19 = arith.constant dense<0.000000e+00> : vector<32x128xf32>
    %27 = tpu.matmul %22, %26, %cst_19 {dimension_numbers = #tpu.dot_dimension_numbers<[1], [0], [0], [1], [0, 0, 1, 1], [], []>} : vector<32x16xbf16>, vector<16x128xbf16>, vector<32x128xf32> -> vector<32x128xf32>
    %28 = vector.broadcast %23 : vector<32x1xf32> to vector<32x128xf32>
    %29 = arith.addf %27, %28 : vector<32x128xf32>
    %cst_20 = arith.constant 0.000000e+00 : f32
    %30 = vector.broadcast %cst_20 : f32 to vector<32x128xf32>
    %31 = arith.maximumf %29, %30 : vector<32x128xf32>
    %32 = arith.truncf %31 : vector<32x128xf32> to vector<32x128xbf16>
    %c0_21 = arith.constant 0 : index
    %c0_22 = arith.constant 0 : index
    %33 = vector.load %arg10[%c0_21, %c0_22] : memref<16x32xbf16, #tpu.memory_space<vmem>>, vector<16x32xbf16>
    %cst_23 = arith.constant dense<0.000000e+00> : vector<16x128xf32>
    %34 = tpu.matmul %33, %32, %cst_23 {dimension_numbers = #tpu.dot_dimension_numbers<[1], [0], [0], [1], [0, 0, 1, 1], [], []>} : vector<16x32xbf16>, vector<32x128xbf16>, vector<16x128xf32> -> vector<16x128xf32>
    %35 = vector.extract_strided_slice %1 {offsets = [0, 2], sizes = [16, 1], strides = [1, 1]} : vector<20x6xf32> to vector<16x1xf32>
    %36 = math.exp %35 : vector<16x1xf32>
    %c0_24 = arith.constant 0 : index
    %c0_25 = arith.constant 0 : index
    %37 = vector.load %arg11[%c0_24, %c0_25] : memref<32x16xbf16, #tpu.memory_space<vmem>>, vector<32x16xbf16>
    %c0_26 = arith.constant 0 : index
    %c0_27 = arith.constant 0 : index
    %38 = vector.load %arg12[%c0_26, %c0_27] : memref<32x1xf32, #tpu.memory_space<vmem>>, vector<32x1xf32>
    %39 = vector.broadcast %36 : vector<16x1xf32> to vector<16x128xf32>
    %40 = arith.mulf %34, %39 : vector<16x128xf32>
    %41 = arith.truncf %40 : vector<16x128xf32> to vector<16x128xbf16>
    %cst_28 = arith.constant dense<0.000000e+00> : vector<32x128xf32>
    %42 = tpu.matmul %37, %41, %cst_28 {dimension_numbers = #tpu.dot_dimension_numbers<[1], [0], [0], [1], [0, 0, 1, 1], [], []>} : vector<32x16xbf16>, vector<16x128xbf16>, vector<32x128xf32> -> vector<32x128xf32>
    %43 = vector.broadcast %38 : vector<32x1xf32> to vector<32x128xf32>
    %44 = arith.addf %42, %43 : vector<32x128xf32>
    %cst_29 = arith.constant 0.000000e+00 : f32
    %45 = vector.broadcast %cst_29 : f32 to vector<32x128xf32>
    %46 = arith.maximumf %44, %45 : vector<32x128xf32>
    %47 = arith.truncf %46 : vector<32x128xf32> to vector<32x128xbf16>
    %c0_30 = arith.constant 0 : index
    %c0_31 = arith.constant 0 : index
    %48 = vector.load %arg13[%c0_30, %c0_31] : memref<20x32xbf16, #tpu.memory_space<vmem>>, vector<20x32xbf16>
    %cst_32 = arith.constant dense<0.000000e+00> : vector<20x128xf32>
    %49 = tpu.matmul %48, %47, %cst_32 {dimension_numbers = #tpu.dot_dimension_numbers<[1], [0], [0], [1], [0, 0, 1, 1], [], []>} : vector<20x32xbf16>, vector<32x128xbf16>, vector<20x128xf32> -> vector<20x128xf32>
    %50 = vector.extract_strided_slice %1 {offsets = [0, 3], sizes = [20, 1], strides = [1, 1]} : vector<20x6xf32> to vector<20x1xf32>
    %51 = math.exp %50 : vector<20x1xf32>
    %c0_33 = arith.constant 0 : index
    %c0_34 = arith.constant 0 : index
    %52 = vector.load %arg14[%c0_33, %c0_34] : memref<32x20xbf16, #tpu.memory_space<vmem>>, vector<32x20xbf16>
    %c0_35 = arith.constant 0 : index
    %c0_36 = arith.constant 0 : index
    %53 = vector.load %arg15[%c0_35, %c0_36] : memref<32x1xf32, #tpu.memory_space<vmem>>, vector<32x1xf32>
    %54 = vector.broadcast %51 : vector<20x1xf32> to vector<20x128xf32>
    %55 = arith.mulf %49, %54 : vector<20x128xf32>
    %56 = arith.truncf %55 : vector<20x128xf32> to vector<20x128xbf16>
    %cst_37 = arith.constant dense<0.000000e+00> : vector<32x128xf32>
    %57 = tpu.matmul %52, %56, %cst_37 {dimension_numbers = #tpu.dot_dimension_numbers<[1], [0], [0], [1], [0, 0, 1, 1], [], []>} : vector<32x20xbf16>, vector<20x128xbf16>, vector<32x128xf32> -> vector<32x128xf32>
    %58 = vector.broadcast %53 : vector<32x1xf32> to vector<32x128xf32>
    %59 = arith.addf %57, %58 : vector<32x128xf32>
    %cst_38 = arith.constant 0.000000e+00 : f32
    %60 = vector.broadcast %cst_38 : f32 to vector<32x128xf32>
    %61 = arith.maximumf %59, %60 : vector<32x128xf32>
    %62 = arith.truncf %61 : vector<32x128xf32> to vector<32x128xbf16>
    %c0_39 = arith.constant 0 : index
    %c0_40 = arith.constant 0 : index
    %63 = vector.load %arg16[%c0_39, %c0_40] : memref<20x32xbf16, #tpu.memory_space<vmem>>, vector<20x32xbf16>
    %c0_41 = arith.constant 0 : index
    %c0_42 = arith.constant 0 : index
    %64 = vector.load %arg17[%c0_41, %c0_42] : memref<20x16xbf16, #tpu.memory_space<vmem>>, vector<20x16xbf16>
    %cst_43 = arith.constant dense<0.000000e+00> : vector<20x128xf32>
    %65 = tpu.matmul %63, %62, %cst_43 {dimension_numbers = #tpu.dot_dimension_numbers<[1], [0], [0], [1], [0, 0, 1, 1], [], []>} : vector<20x32xbf16>, vector<32x128xbf16>, vector<20x128xf32> -> vector<20x128xf32>
    %cst_44 = arith.constant dense<0.000000e+00> : vector<20x128xf32>
    %66 = tpu.matmul %64, %2, %cst_44 {dimension_numbers = #tpu.dot_dimension_numbers<[1], [0], [0], [1], [0, 0, 1, 1], [], []>} : vector<20x16xbf16>, vector<16x128xbf16>, vector<20x128xf32> -> vector<20x128xf32>
    %67 = arith.addf %65, %66 : vector<20x128xf32>
    %68 = vector.extract_strided_slice %1 {offsets = [0, 4], sizes = [20, 1], strides = [1, 1]} : vector<20x6xf32> to vector<20x1xf32>
    %69 = math.exp %68 : vector<20x1xf32>
    %c0_45 = arith.constant 0 : index
    %c0_46 = arith.constant 0 : index
    %70 = vector.load %arg18[%c0_45, %c0_46] : memref<32x20xbf16, #tpu.memory_space<vmem>>, vector<32x20xbf16>
    %c0_47 = arith.constant 0 : index
    %c0_48 = arith.constant 0 : index
    %71 = vector.load %arg19[%c0_47, %c0_48] : memref<32x1xf32, #tpu.memory_space<vmem>>, vector<32x1xf32>
    %72 = vector.broadcast %69 : vector<20x1xf32> to vector<20x128xf32>
    %73 = arith.mulf %67, %72 : vector<20x128xf32>
    %74 = arith.truncf %73 : vector<20x128xf32> to vector<20x128xbf16>
    %cst_49 = arith.constant dense<0.000000e+00> : vector<32x128xf32>
    %75 = tpu.matmul %70, %74, %cst_49 {dimension_numbers = #tpu.dot_dimension_numbers<[1], [0], [0], [1], [0, 0, 1, 1], [], []>} : vector<32x20xbf16>, vector<20x128xbf16>, vector<32x128xf32> -> vector<32x128xf32>
    %76 = vector.broadcast %71 : vector<32x1xf32> to vector<32x128xf32>
    %77 = arith.addf %75, %76 : vector<32x128xf32>
    %cst_50 = arith.constant 0.000000e+00 : f32
    %78 = vector.broadcast %cst_50 : f32 to vector<32x128xf32>
    %79 = arith.maximumf %77, %78 : vector<32x128xf32>
    %80 = arith.truncf %79 : vector<32x128xf32> to vector<32x128xbf16>
    %c0_51 = arith.constant 0 : index
    %c0_52 = arith.constant 0 : index
    %81 = vector.load %arg20[%c0_51, %c0_52] : memref<20x32xbf16, #tpu.memory_space<vmem>>, vector<20x32xbf16>
    %cst_53 = arith.constant dense<0.000000e+00> : vector<20x128xf32>
    %82 = tpu.matmul %81, %80, %cst_53 {dimension_numbers = #tpu.dot_dimension_numbers<[1], [0], [0], [1], [0, 0, 1, 1], [], []>} : vector<20x32xbf16>, vector<32x128xbf16>, vector<20x128xf32> -> vector<20x128xf32>
    %83 = vector.extract_strided_slice %1 {offsets = [0, 5], sizes = [20, 1], strides = [1, 1]} : vector<20x6xf32> to vector<20x1xf32>
    %84 = math.exp %83 : vector<20x1xf32>
    %c0_54 = arith.constant 0 : index
    %c0_55 = arith.constant 0 : index
    %85 = vector.load %arg21[%c0_54, %c0_55] : memref<8x20xbf16, #tpu.memory_space<vmem>>, vector<8x20xbf16>
    %c0_56 = arith.constant 0 : index
    %c0_57 = arith.constant 0 : index
    %86 = vector.load %arg22[%c0_56, %c0_57] : memref<8x1xf32, #tpu.memory_space<vmem>>, vector<8x1xf32>
    %87 = vector.broadcast %84 : vector<20x1xf32> to vector<20x128xf32>
    %88 = arith.mulf %82, %87 : vector<20x128xf32>
    %89 = arith.truncf %88 : vector<20x128xf32> to vector<20x128xbf16>
    %cst_58 = arith.constant dense<0.000000e+00> : vector<8x128xf32>
    %90 = tpu.matmul %85, %89, %cst_58 {dimension_numbers = #tpu.dot_dimension_numbers<[1], [0], [0], [1], [0, 0, 1, 1], [], []>} : vector<8x20xbf16>, vector<20x128xbf16>, vector<8x128xf32> -> vector<8x128xf32>
    %91 = vector.broadcast %86 : vector<8x1xf32> to vector<8x128xf32>
    %92 = arith.addf %90, %91 : vector<8x128xf32>
    %93 = math.tanh %92 : vector<8x128xf32>
    %c0_59 = arith.constant 0 : index
    %c0_60 = arith.constant 0 : index
    %94 = vector.load %arg23[%c0_59, %c0_60] : memref<8x128xf32, #tpu.memory_space<vmem>>, vector<8x128xf32>
    tpu.vector_store %arg23[%c0_59, %c0_60], %93 {strides = array<i32>} : memref<8x128xf32, #tpu.memory_space<vmem>>, vector<8x128xf32>,
    return
  }
  func.func @transform_0(%arg0: i32, %arg1: i32) -> (i32, i32, i32) {
    %c0_i32 = arith.constant 0 : i32
    %c0_i32_0 = arith.constant 0 : i32
    %c0_i32_1 = arith.constant 0 : i32
    return %arg0, %c0_i32, %c0_i32_0 : i32, i32, i32
  }
  func.func @transform_1(%arg0: i32, %arg1: i32) -> (i32, i32) {
    %c1_i32 = arith.constant 1 : i32
    %0 = arith.muli %arg0, %c1_i32 : i32
    %1 = arith.addi %0, %arg1 : i32
    %c0_i32 = arith.constant 0 : i32
    %c0_i32_0 = arith.constant 0 : i32
    return %c0_i32, %1 : i32, i32
  }
  func.func @transform_2(%arg0: i32, %arg1: i32) -> (i32, i32) {
    %c0_i32 = arith.constant 0 : i32
    %c0_i32_0 = arith.constant 0 : i32
    %c0_i32_1 = arith.constant 0 : i32
    return %c0_i32, %c0_i32_0 : i32, i32
  }
  func.func @transform_3(%arg0: i32, %arg1: i32) -> (i32, i32) {
    %c0_i32 = arith.constant 0 : i32
    %c0_i32_0 = arith.constant 0 : i32
    %c0_i32_1 = arith.constant 0 : i32
    return %c0_i32, %c0_i32_0 : i32, i32
  }
  func.func @transform_4(%arg0: i32, %arg1: i32) -> (i32, i32) {
    %c0_i32 = arith.constant 0 : i32
    %c0_i32_0 = arith.constant 0 : i32
    %c0_i32_1 = arith.constant 0 : i32
    return %c0_i32, %c0_i32_0 : i32, i32
  }
  func.func @transform_5(%arg0: i32, %arg1: i32) -> (i32, i32) {
    %c0_i32 = arith.constant 0 : i32
    %c0_i32_0 = arith.constant 0 : i32
    %c0_i32_1 = arith.constant 0 : i32
    return %c0_i32, %c0_i32_0 : i32, i32
  }
  func.func @transform_6(%arg0: i32, %arg1: i32) -> (i32, i32) {
    %c0_i32 = arith.constant 0 : i32
    %c0_i32_0 = arith.constant 0 : i32
    %c0_i32_1 = arith.constant 0 : i32
    return %c0_i32, %c0_i32_0 : i32, i32
  }
  func.func @transform_7(%arg0: i32, %arg1: i32) -> (i32, i32) {
    %c0_i32 = arith.constant 0 : i32
    %c0_i32_0 = arith.constant 0 : i32
    %c0_i32_1 = arith.constant 0 : i32
    return %c0_i32, %c0_i32_0 : i32, i32
  }
  func.func @transform_8(%arg0: i32, %arg1: i32) -> (i32, i32) {
    %c0_i32 = arith.constant 0 : i32
    %c0_i32_0 = arith.constant 0 : i32
    %c0_i32_1 = arith.constant 0 : i32
    return %c0_i32, %c0_i32_0 : i32, i32
  }
  func.func @transform_9(%arg0: i32, %arg1: i32) -> (i32, i32) {
    %c0_i32 = arith.constant 0 : i32
    %c0_i32_0 = arith.constant 0 : i32
    %c0_i32_1 = arith.constant 0 : i32
    return %c0_i32, %c0_i32_0 : i32, i32
  }
  func.func @transform_10(%arg0: i32, %arg1: i32) -> (i32, i32) {
    %c0_i32 = arith.constant 0 : i32
    %c0_i32_0 = arith.constant 0 : i32
    %c0_i32_1 = arith.constant 0 : i32
    return %c0_i32, %c0_i32_0 : i32, i32
  }
  func.func @transform_11(%arg0: i32, %arg1: i32) -> (i32, i32) {
    %c0_i32 = arith.constant 0 : i32
    %c0_i32_0 = arith.constant 0 : i32
    %c0_i32_1 = arith.constant 0 : i32
    return %c0_i32, %c0_i32_0 : i32, i32
  }
  func.func @transform_12(%arg0: i32, %arg1: i32) -> (i32, i32) {
    %c0_i32 = arith.constant 0 : i32
    %c0_i32_0 = arith.constant 0 : i32
    %c0_i32_1 = arith.constant 0 : i32
    return %c0_i32, %c0_i32_0 : i32, i32
  }
  func.func @transform_13(%arg0: i32, %arg1: i32) -> (i32, i32) {
    %c0_i32 = arith.constant 0 : i32
    %c0_i32_0 = arith.constant 0 : i32
    %c0_i32_1 = arith.constant 0 : i32
    return %c0_i32, %c0_i32_0 : i32, i32
  }
  func.func @transform_14(%arg0: i32, %arg1: i32) -> (i32, i32) {
    %c0_i32 = arith.constant 0 : i32
    %c0_i32_0 = arith.constant 0 : i32
    %c0_i32_1 = arith.constant 0 : i32
    return %c0_i32, %c0_i32_0 : i32, i32
  }
  func.func @transform_15(%arg0: i32, %arg1: i32) -> (i32, i32) {
    %c0_i32 = arith.constant 0 : i32
    %c0_i32_0 = arith.constant 0 : i32
    %c0_i32_1 = arith.constant 0 : i32
    return %c0_i32, %c0_i32_0 : i32, i32
  }
  func.func @transform_16(%arg0: i32, %arg1: i32) -> (i32, i32) {
    %c0_i32 = arith.constant 0 : i32
    %c0_i32_0 = arith.constant 0 : i32
    %c0_i32_1 = arith.constant 0 : i32
    return %c0_i32, %c0_i32_0 : i32, i32
  }
  func.func @transform_17(%arg0: i32, %arg1: i32) -> (i32, i32) {
    %c0_i32 = arith.constant 0 : i32
    %c0_i32_0 = arith.constant 0 : i32
    %c0_i32_1 = arith.constant 0 : i32
    return %c0_i32, %c0_i32_0 : i32, i32
  }
  func.func @transform_18(%arg0: i32, %arg1: i32) -> (i32, i32) {
    %c0_i32 = arith.constant 0 : i32
    %c0_i32_0 = arith.constant 0 : i32
    %c0_i32_1 = arith.constant 0 : i32
    return %c0_i32, %c0_i32_0 : i32, i32
  }
  func.func @transform_19(%arg0: i32, %arg1: i32) -> (i32, i32) {
    %c0_i32 = arith.constant 0 : i32
    %c0_i32_0 = arith.constant 0 : i32
    %c0_i32_1 = arith.constant 0 : i32
    return %c0_i32, %c0_i32_0 : i32, i32
  }
  func.func @transform_20(%arg0: i32, %arg1: i32) -> (i32, i32) {
    %c0_i32 = arith.constant 0 : i32
    %c0_i32_0 = arith.constant 0 : i32
    %c0_i32_1 = arith.constant 0 : i32
    return %c0_i32, %c0_i32_0 : i32, i32
  }
  func.func @transform_21(%arg0: i32, %arg1: i32) -> (i32, i32) {
    %c1_i32 = arith.constant 1 : i32
    %0 = arith.muli %arg0, %c1_i32 : i32
    %1 = arith.addi %0, %arg1 : i32
    %c0_i32 = arith.constant 0 : i32
    %c0_i32_0 = arith.constant 0 : i32
    return %c0_i32, %1 : i32, i32
  }
}

</mosaic_0001>

<llo_original>
// kernel: dict_acc_forward.1
$region0: #{dict_acc_forward.1}
  #allocation0 [shape = 'u32[]', space=smem, size = 0x4, offset = 0x4, fixed_abs, tag = 'smem constant byte address 0x4 - core index']
  #allocation1 [shape = 'u32[72,128]{1,0:T(1,128)}', space=vmem, size = 0x9000, scoped, tag = 'internal scratch']
  %s0 = inlined_call_operand.vmem [shape: f32[2,20,6], index: 0, kind: input, shape index: {}]
  %s1 = inlined_call_operand.vmem [shape: bf16[16,256], index: 1, kind: input, shape index: {}]
  %s2 = inlined_call_operand.vmem [shape: bf16[16,16], index: 2, kind: input, shape index: {}]
  %s3 = inlined_call_operand.vmem [shape: bf16[32,16], index: 3, kind: input, shape index: {}]
  %s4 = inlined_call_operand.vmem [shape: f32[32,1], index: 4, kind: input, shape index: {}]
  %s5 = inlined_call_operand.vmem [shape: bf16[16,32], index: 5, kind: input, shape index: {}]
  %s6 = inlined_call_operand.vmem [shape: bf16[32,16], index: 6, kind: input, shape index: {}]
  %s7 = inlined_call_operand.vmem [shape: f32[32,1], index: 7, kind: input, shape index: {}]
  %s8 = inlined_call_operand.vmem [shape: bf16[16,32], index: 8, kind: input, shape index: {}]
  %s9 = inlined_call_operand.vmem [shape: bf16[32,16], index: 9, kind: input, shape index: {}]
  %s10 = inlined_call_operand.vmem [shape: f32[32,1], index: 10, kind: input, shape index: {}]
  %s11 = inlined_call_operand.vmem [shape: bf16[20,32], index: 11, kind: input, shape index: {}]
  %s12 = inlined_call_operand.vmem [shape: bf16[32,20], index: 12, kind: input, shape index: {}]
  %s13 = inlined_call_operand.vmem [shape: f32[32,1], index: 13, kind: input, shape index: {}]
  %s14 = inlined_call_operand.vmem [shape: bf16[20,32], index: 14, kind: input, shape index: {}]
  %s15 = inlined_call_operand.vmem [shape: bf16[20,16], index: 15, kind: input, shape index: {}]
  %s16 = inlined_call_operand.vmem [shape: bf16[32,20], index: 16, kind: input, shape index: {}]
  %s17 = inlined_call_operand.vmem [shape: f32[32,1], index: 17, kind: input, shape index: {}]
  %s18 = inlined_call_operand.vmem [shape: bf16[20,32], index: 18, kind: input, shape index: {}]
  %s19 = inlined_call_operand.vmem [shape: bf16[8,20], index: 19, kind: input, shape index: {}]
  %s20 = inlined_call_operand.vmem [shape: f32[8,1], index: 20, kind: input, shape index: {}]
  %s21 = inlined_call_operand.hbm [shape: f32[8,256], index: 21, kind: output, shape index: {}]
  %s22 = sld [smem:[#allocation0]]
  $region158: #{dict_acc_forward.1} parent=0
    _
  %s24 = ssub.s32 1, %s22
  %s25 = scalar_select 0, %s24, %s22
  $region1: #{dict_acc_forward.1} parent=0
    #allocation2 [shape = 'u8[8192]{0}', space=vmem, size = 0x2000, scoped, tag = 'input window, operand 1']
    #allocation3 [shape = 'u8[8192]{0}', space=vmem, size = 0x2000, scoped, tag = 'output window, operand 0']
    #allocation4 [shape = 's32[2]{0}', space=sflag, size = 0x8, scoped, tag = 'scoped memory for dict_acc_forward.1']
    %26 = vsyncpa [#allocation4], 0
    %s27 = scalar_lea.sflag [#allocation4], 1
    %28 = vsyncpa %s27, 0
    loop: start=0, step=1, limit=4
    $region2: #{dict_acc_forward.1} parent=1 // loop_pre_header
      _
    $region3: #{dict_acc_forward.1} parent=1 // loop_header
      %s30 = sphi 0, %s34
      %p31 = scmp.ge.s32.totalorder %s30, 4
      %s37 = sphi 0, %s49
      %s38 = sphi 0, %s45
      %s39 = sphi 0, %s37
      %s40 = sphi 0, %s38
      %s41 = sphi 0, %s39
      %s42 = sphi 0, %s40
      %s52 = sphi 0, %s54
      %s55 = sphi 0, %s52
      %s56 = sphi 0, %s55
      %s72 = sphi 0, %s56
      %s80 = sphi 0, %s82
      %s83 = sphi 0, %s80
      %s84 = sphi 0, %s83
      %s100 = sphi 0, %s84
      %s104 = sphi 0, %s104
      %s106 = sphi 0, %s104
      %s107 = sphi 0, %s106
      %s121 = sphi 0, %s107
      %s125 = sphi 0, %s125
      %s127 = sphi 0, %s125
      %s128 = sphi 0, %s127
      %s142 = sphi 0, %s128
      %s146 = sphi 0, %s146
      %s148 = sphi 0, %s146
      %s149 = sphi 0, %s148
      %s163 = sphi 0, %s149
      %s167 = sphi 0, %s167
      %s169 = sphi 0, %s167
      %s170 = sphi 0, %s169
      %s184 = sphi 0, %s170
      %s188 = sphi 0, %s188
      %s190 = sphi 0, %s188
      %s191 = sphi 0, %s190
      %s205 = sphi 0, %s191
      %s209 = sphi 0, %s209
      %s211 = sphi 0, %s209
      %s212 = sphi 0, %s211
      %s226 = sphi 0, %s212
      %s230 = sphi 0, %s230
      %s232 = sphi 0, %s230
      %s233 = sphi 0, %s232
      %s247 = sphi 0, %s233
      %s251 = sphi 0, %s251
      %s253 = sphi 0, %s251
      %s254 = sphi 0, %s253
      %s268 = sphi 0, %s254
      %s272 = sphi 0, %s272
      %s274 = sphi 0, %s272
      %s275 = sphi 0, %s274
      %s289 = sphi 0, %s275
      %s293 = sphi 0, %s293
      %s295 = sphi 0, %s293
      %s296 = sphi 0, %s295
      %s310 = sphi 0, %s296
      %s314 = sphi 0, %s314
      %s316 = sphi 0, %s314
      %s317 = sphi 0, %s316
      %s331 = sphi 0, %s317
      %s335 = sphi 0, %s335
      %s337 = sphi 0, %s335
      %s338 = sphi 0, %s337
      %s352 = sphi 0, %s338
      %s356 = sphi 0, %s356
      %s358 = sphi 0, %s356
      %s359 = sphi 0, %s358
      %s373 = sphi 0, %s359
      %s377 = sphi 0, %s377
      %s379 = sphi 0, %s377
      %s380 = sphi 0, %s379
      %s394 = sphi 0, %s380
      %s398 = sphi 0, %s398
      %s400 = sphi 0, %s398
      %s401 = sphi 0, %s400
      %s415 = sphi 0, %s401
      %s419 = sphi 0, %s419
      %s421 = sphi 0, %s419
      %s422 = sphi 0, %s421
      %s436 = sphi 0, %s422
      %s440 = sphi 0, %s440
      %s442 = sphi 0, %s440
      %s443 = sphi 0, %s442
      %s457 = sphi 0, %s443
      %s461 = sphi 0, %s461
      %s463 = sphi 0, %s461
      %s464 = sphi 0, %s463
      %s478 = sphi 0, %s464
      %s482 = sphi 0, %s482
      %s484 = sphi 0, %s482
      %s485 = sphi 0, %s484
      %s499 = sphi 0, %s485
      %s507 = sphi 0, %s509
      %s510 = sphi 0, %s507
      %s511 = sphi 0, %s510
      %s527 = sphi 0, %s511
    $region4: #{dict_acc_forward.1} parent=1 // loop_header_branch
      %33 = sbr.rel (%p31) target = $region8
    $region5: #{dict_acc_forward.1} parent=1 // loop_body
      %s35 = ssub.s32 %s30, 1
      %s36 = ssub.s32 %s30, 2
      %s43 = sadd.s32 1, %s38
      %p44 = scmp.ge.s32.totalorder %s43, 1
      %s45 = scalar_select %p44, 0, %s43
      %s46 = sadd.s32 1, %s37
      %s47 = scalar_select %p44, %s46, %s37
      %p48 = scmp.ge.s32.totalorder %s47, 2
      %s49 = scalar_select %p48, 0, %s47
      %s50 = ssub.s32 %s37, %s49
      %p51 = scmp.eq.s32.totalorder %s50, 0
      %s53 = sadd.s32 %s52, 1
      %s54 = scalar_select %p51, %s52, %s53
      %p57 = pneg %p51
      %p58 = scmp.eq.s32.totalorder %s30, 1
      %p59 = por %p57, %p58
      %p60 = scmp.ne.s32.totalorder %s52, %s55
      %p61 = scmp.eq.s32.totalorder %s30, 0
      %p62 = por %p60, %p61
      %p63 = scmp.ne.s32.totalorder %s52, %s55
      %p64 = scmp.eq.s32.totalorder %s35, 1
      %p65 = por %p63, %p64
      %p66 = scmp.ne.s32.totalorder %s55, %s56
      %p67 = scmp.eq.s32.totalorder %s35, 0
      %p68 = por %p66, %p67
      %p69 = scmp.ne.s32.totalorder %s55, %s56
      %p70 = scmp.eq.s32.totalorder %s36, 1
      %p71 = por %p69, %p70
      %p73 = scmp.ne.s32.totalorder %s56, %s72
      %p74 = scmp.eq.s32.totalorder %s36, 0
      %p75 = por %p73, %p74
      %s76 = sadd.s32 %s37, %s38
      %s77 = sadd.s32 %s49, %s45
      %s78 = ssub.s32 %s76, %s77
      %p79 = scmp.eq.s32.totalorder %s78, 0
      %s81 = sadd.s32 %s80, 1
      %s82 = scalar_select %p79, %s80, %s81
      %p85 = pneg %p79
      %p86 = scmp.eq.s32.totalorder %s30, 1
      %p87 = por %p85, %p86
      %p88 = scmp.ne.s32.totalorder %s80, %s83
      %p89 = scmp.eq.s32.totalorder %s30, 0
      %p90 = por %p88, %p89
      %p91 = scmp.ne.s32.totalorder %s80, %s83
      %p92 = scmp.eq.s32.totalorder %s35, 1
      %p93 = por %p91, %p92
      %p94 = scmp.ne.s32.totalorder %s83, %s84
      %p95 = scmp.eq.s32.totalorder %s35, 0
      %p96 = por %p94, %p95
      %p97 = scmp.ne.s32.totalorder %s83, %s84
      %p98 = scmp.eq.s32.totalorder %s36, 1
      %p99 = por %p97, %p98
      %p101 = scmp.ne.s32.totalorder %s84, %s100
      %p102 = scmp.eq.s32.totalorder %s36, 0
      %p103 = por %p101, %p102
      %s105 = sadd.s32 %s104, 1
      %p108 = scmp.eq.s32.totalorder %s30, 1
      %p109 = scmp.ne.s32.totalorder %s104, %s106
      %p110 = scmp.eq.s32.totalorder %s30, 0
      %p111 = por %p109, %p110
      %p112 = scmp.ne.s32.totalorder %s104, %s106
      %p113 = scmp.eq.s32.totalorder %s35, 1
      %p114 = por %p112, %p113
      %p115 = scmp.ne.s32.totalorder %s106, %s107
      %p116 = scmp.eq.s32.totalorder %s35, 0
      %p117 = por %p115, %p116
      %p118 = scmp.ne.s32.totalorder %s106, %s107
      %p119 = scmp.eq.s32.totalorder %s36, 1
      %p120 = por %p118, %p119
      %p122 = scmp.ne.s32.totalorder %s107, %s121
      %p123 = scmp.eq.s32.totalorder %s36, 0
      %p124 = por %p122, %p123
      %s126 = sadd.s32 %s125, 1
      %p129 = scmp.eq.s32.totalorder %s30, 1
      %p130 = scmp.ne.s32.totalorder %s125, %s127
      %p131 = scmp.eq.s32.totalorder %s30, 0
      %p132 = por %p130, %p131
      %p133 = scmp.ne.s32.totalorder %s125, %s127
      %p134 = scmp.eq.s32.totalorder %s35, 1
      %p135 = por %p133, %p134
      %p136 = scmp.ne.s32.totalorder %s127, %s128
      %p137 = scmp.eq.s32.totalorder %s35, 0
      %p138 = por %p136, %p137
      %p139 = scmp.ne.s32.totalorder %s127, %s128
      %p140 = scmp.eq.s32.totalorder %s36, 1
      %p141 = por %p139, %p140
      %p143 = scmp.ne.s32.totalorder %s128, %s142
      %p144 = scmp.eq.s32.totalorder %s36, 0
      %p145 = por %p143, %p144
      %s147 = sadd.s32 %s146, 1
      %p150 = scmp.eq.s32.totalorder %s30, 1
      %p151 = scmp.ne.s32.totalorder %s146, %s148
      %p152 = scmp.eq.s32.totalorder %s30, 0
      %p153 = por %p151, %p152
      %p154 = scmp.ne.s32.totalorder %s146, %s148
      %p155 = scmp.eq.s32.totalorder %s35, 1
      %p156 = por %p154, %p155
      %p157 = scmp.ne.s32.totalorder %s148, %s149
      %p158 = scmp.eq.s32.totalorder %s35, 0
      %p159 = por %p157, %p158
      %p160 = scmp.ne.s32.totalorder %s148, %s149
      %p161 = scmp.eq.s32.totalorder %s36, 1
      %p162 = por %p160, %p161
      %p164 = scmp.ne.s32.totalorder %s149, %s163
      %p165 = scmp.eq.s32.totalorder %s36, 0
      %p166 = por %p164, %p165
      %s168 = sadd.s32 %s167, 1
      %p171 = scmp.eq.s32.totalorder %s30, 1
      %p172 = scmp.ne.s32.totalorder %s167, %s169
      %p173 = scmp.eq.s32.totalorder %s30, 0
      %p174 = por %p172, %p173
      %p175 = scmp.ne.s32.totalorder %s167, %s169
      %p176 = scmp.eq.s32.totalorder %s35, 1
      %p177 = por %p175, %p176
      %p178 = scmp.ne.s32.totalorder %s169, %s170
      %p179 = scmp.eq.s32.totalorder %s35, 0
      %p180 = por %p178, %p179
      %p181 = scmp.ne.s32.totalorder %s169, %s170
      %p182 = scmp.eq.s32.totalorder %s36, 1
      %p183 = por %p181, %p182
      %p185 = scmp.ne.s32.totalorder %s170, %s184
      %p186 = scmp.eq.s32.totalorder %s36, 0
      %p187 = por %p185, %p186
      %s189 = sadd.s32 %s188, 1
      %p192 = scmp.eq.s32.totalorder %s30, 1
      %p193 = scmp.ne.s32.totalorder %s188, %s190
      %p194 = scmp.eq.s32.totalorder %s30, 0
      %p195 = por %p193, %p194
      %p196 = scmp.ne.s32.totalorder %s188, %s190
      %p197 = scmp.eq.s32.totalorder %s35, 1
      %p198 = por %p196, %p197
      %p199 = scmp.ne.s32.totalorder %s190, %s191
      %p200 = scmp.eq.s32.totalorder %s35, 0
      %p201 = por %p199, %p200
      %p202 = scmp.ne.s32.totalorder %s190, %s191
      %p203 = scmp.eq.s32.totalorder %s36, 1
      %p204 = por %p202, %p203
      %p206 = scmp.ne.s32.totalorder %s191, %s205
      %p207 = scmp.eq.s32.totalorder %s36, 0
      %p208 = por %p206, %p207
      %s210 = sadd.s32 %s209, 1
      %p213 = scmp.eq.s32.totalorder %s30, 1
      %p214 = scmp.ne.s32.totalorder %s209, %s211
      %p215 = scmp.eq.s32.totalorder %s30, 0
      %p216 = por %p214, %p215
      %p217 = scmp.ne.s32.totalorder %s209, %s211
      %p218 = scmp.eq.s32.totalorder %s35, 1
      %p219 = por %p217, %p218
      %p220 = scmp.ne.s32.totalorder %s211, %s212
      %p221 = scmp.eq.s32.totalorder %s35, 0
      %p222 = por %p220, %p221
      %p223 = scmp.ne.s32.totalorder %s211, %s212
      %p224 = scmp.eq.s32.totalorder %s36, 1
      %p225 = por %p223, %p224
      %p227 = scmp.ne.s32.totalorder %s212, %s226
      %p228 = scmp.eq.s32.totalorder %s36, 0
      %p229 = por %p227, %p228
      %s231 = sadd.s32 %s230, 1
      %p234 = scmp.eq.s32.totalorder %s30, 1
      %p235 = scmp.ne.s32.totalorder %s230, %s232
      %p236 = scmp.eq.s32.totalorder %s30, 0
      %p237 = por %p235, %p236
      %p238 = scmp.ne.s32.totalorder %s230, %s232
      %p239 = scmp.eq.s32.totalorder %s35, 1
      %p240 = por %p238, %p239
      %p241 = scmp.ne.s32.totalorder %s232, %s233
      %p242 = scmp.eq.s32.totalorder %s35, 0
      %p243 = por %p241, %p242
      %p244 = scmp.ne.s32.totalorder %s232, %s233
      %p245 = scmp.eq.s32.totalorder %s36, 1
      %p246 = por %p244, %p245
      %p248 = scmp.ne.s32.totalorder %s233, %s247
      %p249 = scmp.eq.s32.totalorder %s36, 0
      %p250 = por %p248, %p249
      %s252 = sadd.s32 %s251, 1
      %p255 = scmp.eq.s32.totalorder %s30, 1
      %p256 = scmp.ne.s32.totalorder %s251, %s253
      %p257 = scmp.eq.s32.totalorder %s30, 0
      %p258 = por %p256, %p257
      %p259 = scmp.ne.s32.totalorder %s251, %s253
      %p260 = scmp.eq.s32.totalorder %s35, 1
      %p261 = por %p259, %p260
      %p262 = scmp.ne.s32.totalorder %s253, %s254
      %p263 = scmp.eq.s32.totalorder %s35, 0
      %p264 = por %p262, %p263
      %p265 = scmp.ne.s32.totalorder %s253, %s254
      %p266 = scmp.eq.s32.totalorder %s36, 1
      %p267 = por %p265, %p266
      %p269 = scmp.ne.s32.totalorder %s254, %s268
      %p270 = scmp.eq.s32.totalorder %s36, 0
      %p271 = por %p269, %p270
      %s273 = sadd.s32 %s272, 1
      %p276 = scmp.eq.s32.totalorder %s30, 1
      %p277 = scmp.ne.s32.totalorder %s272, %s274
      %p278 = scmp.eq.s32.totalorder %s30, 0
      %p279 = por %p277, %p278
      %p280 = scmp.ne.s32.totalorder %s272, %s274
      %p281 = scmp.eq.s32.totalorder %s35, 1
      %p282 = por %p280, %p281
      %p283 = scmp.ne.s32.totalorder %s274, %s275
      %p284 = scmp.eq.s32.totalorder %s35, 0
      %p285 = por %p283, %p284
      %p286 = scmp.ne.s32.totalorder %s274, %s275
      %p287 = scmp.eq.s32.totalorder %s36, 1
      %p288 = por %p286, %p287
      %p290 = scmp.ne.s32.totalorder %s275, %s289
      %p291 = scmp.eq.s32.totalorder %s36, 0
      %p292 = por %p290, %p291
      %s294 = sadd.s32 %s293, 1
      %p297 = scmp.eq.s32.totalorder %s30, 1
      %p298 = scmp.ne.s32.totalorder %s293, %s295
      %p299 = scmp.eq.s32.totalorder %s30, 0
      %p300 = por %p298, %p299
      %p301 = scmp.ne.s32.totalorder %s293, %s295
      %p302 = scmp.eq.s32.totalorder %s35, 1
      %p303 = por %p301, %p302
      %p304 = scmp.ne.s32.totalorder %s295, %s296
      %p305 = scmp.eq.s32.totalorder %s35, 0
      %p306 = por %p304, %p305
      %p307 = scmp.ne.s32.totalorder %s295, %s296
      %p308 = scmp.eq.s32.totalorder %s36, 1
      %p309 = por %p307, %p308
      %p311 = scmp.ne.s32.totalorder %s296, %s310
      %p312 = scmp.eq.s32.totalorder %s36, 0
      %p313 = por %p311, %p312
      %s315 = sadd.s32 %s314, 1
      %p318 = scmp.eq.s32.totalorder %s30, 1
      %p319 = scmp.ne.s32.totalorder %s314, %s316
      %p320 = scmp.eq.s32.totalorder %s30, 0
      %p321 = por %p319, %p320
      %p322 = scmp.ne.s32.totalorder %s314, %s316
      %p323 = scmp.eq.s32.totalorder %s35, 1
      %p324 = por %p322, %p323
      %p325 = scmp.ne.s32.totalorder %s316, %s317
      %p326 = scmp.eq.s32.totalorder %s35, 0
      %p327 = por %p325, %p326
      %p328 = scmp.ne.s32.totalorder %s316, %s317
      %p329 = scmp.eq.s32.totalorder %s36, 1
      %p330 = por %p328, %p329
      %p332 = scmp.ne.s32.totalorder %s317, %s331
      %p333 = scmp.eq.s32.totalorder %s36, 0
      %p334 = por %p332, %p333
      %s336 = sadd.s32 %s335, 1
      %p339 = scmp.eq.s32.totalorder %s30, 1
      %p340 = scmp.ne.s32.totalorder %s335, %s337
      %p341 = scmp.eq.s32.totalorder %s30, 0
      %p342 = por %p340, %p341
      %p343 = scmp.ne.s32.totalorder %s335, %s337
      %p344 = scmp.eq.s32.totalorder %s35, 1
      %p345 = por %p343, %p344
      %p346 = scmp.ne.s32.totalorder %s337, %s338
      %p347 = scmp.eq.s32.totalorder %s35, 0
      %p348 = por %p346, %p347
      %p349 = scmp.ne.s32.totalorder %s337, %s338
      %p350 = scmp.eq.s32.totalorder %s36, 1
      %p351 = por %p349, %p350
      %p353 = scmp.ne.s32.totalorder %s338, %s352
      %p354 = scmp.eq.s32.totalorder %s36, 0
      %p355 = por %p353, %p354
      %s357 = sadd.s32 %s356, 1
      %p360 = scmp.eq.s32.totalorder %s30, 1
      %p361 = scmp.ne.s32.totalorder %s356, %s358
      %p362 = scmp.eq.s32.totalorder %s30, 0
      %p363 = por %p361, %p362
      %p364 = scmp.ne.s32.totalorder %s356, %s358
      %p365 = scmp.eq.s32.totalorder %s35, 1
      %p366 = por %p364, %p365
      %p367 = scmp.ne.s32.totalorder %s358, %s359
      %p368 = scmp.eq.s32.totalorder %s35, 0
      %p369 = por %p367, %p368
      %p370 = scmp.ne.s32.totalorder %s358, %s359
      %p371 = scmp.eq.s32.totalorder %s36, 1
      %p372 = por %p370, %p371
      %p374 = scmp.ne.s32.totalorder %s359, %s373
      %p375 = scmp.eq.s32.totalorder %s36, 0
      %p376 = por %p374, %p375
      %s378 = sadd.s32 %s377, 1
      %p381 = scmp.eq.s32.totalorder %s30, 1
      %p382 = scmp.ne.s32.totalorder %s377, %s379
      %p383 = scmp.eq.s32.totalorder %s30, 0
      %p384 = por %p382, %p383
      %p385 = scmp.ne.s32.totalorder %s377, %s379
      %p386 = scmp.eq.s32.totalorder %s35, 1
      %p387 = por %p385, %p386
      %p388 = scmp.ne.s32.totalorder %s379, %s380
      %p389 = scmp.eq.s32.totalorder %s35, 0
      %p390 = por %p388, %p389
      %p391 = scmp.ne.s32.totalorder %s379, %s380
      %p392 = scmp.eq.s32.totalorder %s36, 1
      %p393 = por %p391, %p392
      %p395 = scmp.ne.s32.totalorder %s380, %s394
      %p396 = scmp.eq.s32.totalorder %s36, 0
      %p397 = por %p395, %p396
      %s399 = sadd.s32 %s398, 1
      %p402 = scmp.eq.s32.totalorder %s30, 1
      %p403 = scmp.ne.s32.totalorder %s398, %s400
      %p404 = scmp.eq.s32.totalorder %s30, 0
      %p405 = por %p403, %p404
      %p406 = scmp.ne.s32.totalorder %s398, %s400
      %p407 = scmp.eq.s32.totalorder %s35, 1
      %p408 = por %p406, %p407
      %p409 = scmp.ne.s32.totalorder %s400, %s401
      %p410 = scmp.eq.s32.totalorder %s35, 0
      %p411 = por %p409, %p410
      %p412 = scmp.ne.s32.totalorder %s400, %s401
      %p413 = scmp.eq.s32.totalorder %s36, 1
      %p414 = por %p412, %p413
      %p416 = scmp.ne.s32.totalorder %s401, %s415
      %p417 = scmp.eq.s32.totalorder %s36, 0
      %p418 = por %p416, %p417
      %s420 = sadd.s32 %s419, 1
      %p423 = scmp.eq.s32.totalorder %s30, 1
      %p424 = scmp.ne.s32.totalorder %s419, %s421
      %p425 = scmp.eq.s32.totalorder %s30, 0
      %p426 = por %p424, %p425
      %p427 = scmp.ne.s32.totalorder %s419, %s421
      %p428 = scmp.eq.s32.totalorder %s35, 1
      %p429 = por %p427, %p428
      %p430 = scmp.ne.s32.totalorder %s421, %s422
      %p431 = scmp.eq.s32.totalorder %s35, 0
      %p432 = por %p430, %p431
      %p433 = scmp.ne.s32.totalorder %s421, %s422
      %p434 = scmp.eq.s32.totalorder %s36, 1
      %p435 = por %p433, %p434
      %p437 = scmp.ne.s32.totalorder %s422, %s436
      %p438 = scmp.eq.s32.totalorder %s36, 0
      %p439 = por %p437, %p438
      %s441 = sadd.s32 %s440, 1
      %p444 = scmp.eq.s32.totalorder %s30, 1
      %p445 = scmp.ne.s32.totalorder %s440, %s442
      %p446 = scmp.eq.s32.totalorder %s30, 0
      %p447 = por %p445, %p446
      %p448 = scmp.ne.s32.totalorder %s440, %s442
      %p449 = scmp.eq.s32.totalorder %s35, 1
      %p450 = por %p448, %p449
      %p451 = scmp.ne.s32.totalorder %s442, %s443
      %p452 = scmp.eq.s32.totalorder %s35, 0
      %p453 = por %p451, %p452
      %p454 = scmp.ne.s32.totalorder %s442, %s443
      %p455 = scmp.eq.s32.totalorder %s36, 1
      %p456 = por %p454, %p455
      %p458 = scmp.ne.s32.totalorder %s443, %s457
      %p459 = scmp.eq.s32.totalorder %s36, 0
      %p460 = por %p458, %p459
      %s462 = sadd.s32 %s461, 1
      %p465 = scmp.eq.s32.totalorder %s30, 1
      %p466 = scmp.ne.s32.totalorder %s461, %s463
      %p467 = scmp.eq.s32.totalorder %s30, 0
      %p468 = por %p466, %p467
      %p469 = scmp.ne.s32.totalorder %s461, %s463
      %p470 = scmp.eq.s32.totalorder %s35, 1
      %p471 = por %p469, %p470
      %p472 = scmp.ne.s32.totalorder %s463, %s464
      %p473 = scmp.eq.s32.totalorder %s35, 0
      %p474 = por %p472, %p473
      %p475 = scmp.ne.s32.totalorder %s463, %s464
      %p476 = scmp.eq.s32.totalorder %s36, 1
      %p477 = por %p475, %p476
      %p479 = scmp.ne.s32.totalorder %s464, %s478
      %p480 = scmp.eq.s32.totalorder %s36, 0
      %p481 = por %p479, %p480
      %s483 = sadd.s32 %s482, 1
      %p486 = scmp.eq.s32.totalorder %s30, 1
      %p487 = scmp.ne.s32.totalorder %s482, %s484
      %p488 = scmp.eq.s32.totalorder %s30, 0
      %p489 = por %p487, %p488
      %p490 = scmp.ne.s32.totalorder %s482, %s484
      %p491 = scmp.eq.s32.totalorder %s35, 1
      %p492 = por %p490, %p491
      %p493 = scmp.ne.s32.totalorder %s484, %s485
      %p494 = scmp.eq.s32.totalorder %s35, 0
      %p495 = por %p493, %p494
      %p496 = scmp.ne.s32.totalorder %s484, %s485
      %p497 = scmp.eq.s32.totalorder %s36, 1
      %p498 = por %p496, %p497
      %p500 = scmp.ne.s32.totalorder %s485, %s499
      %p501 = scmp.eq.s32.totalorder %s36, 0
      %p502 = por %p500, %p501
      %s503 = sadd.s32 %s37, %s38
      %s504 = sadd.s32 %s49, %s45
      %s505 = ssub.s32 %s503, %s504
      %p506 = scmp.eq.s32.totalorder %s505, 0
      %s508 = sadd.s32 %s507, 1
      %s509 = scalar_select %p506, %s507, %s508
      %p512 = pneg %p506
      %p513 = scmp.eq.s32.totalorder %s30, 1
      %p514 = por %p512, %p513
      %p515 = scmp.ne.s32.totalorder %s507, %s510
      %p516 = scmp.eq.s32.totalorder %s30, 0
      %p517 = por %p515, %p516
      %p518 = scmp.ne.s32.totalorder %s507, %s510
      %p519 = scmp.eq.s32.totalorder %s35, 1
      %p520 = por %p518, %p519
      %p521 = scmp.ne.s32.totalorder %s510, %s511
      %p522 = scmp.eq.s32.totalorder %s35, 0
      %p523 = por %p521, %p522
      %p524 = scmp.ne.s32.totalorder %s510, %s511
      %p525 = scmp.eq.s32.totalorder %s36, 1
      %p526 = por %p524, %p525
      %p528 = scmp.ne.s32.totalorder %s511, %s527
      %p529 = scmp.eq.s32.totalorder %s36, 0
      %p530 = por %p528, %p529
      %p531 = scmp.le.s32.totalorder 1, %s30
      %p532 = scmp.lt.s32.totalorder %s30, 3
      %p533 = pnand %p531, %p532
      %p534 = pneg %p533
      // Predicated region
      $region9: #{dict_acc_forward.1} parent=5 // pred_check
        _
      $region10: #{dict_acc_forward.1} parent=5 // pred_check_branch
        %536 = sbr.rel (%p533) target = $region12
      $region11: #{dict_acc_forward.1} parent=5 // pred_region
        %s537 = ssub.s32 %s30, 1
        // Predicated region
        $region13: #{dict_acc_forward.1} parent=11 // pred_check
          %p538 = pneg %p117
        $region14: #{dict_acc_forward.1} parent=11 // pred_check_branch
          %540 = sbr.rel (%p538) target = $region16
        $region15: #{dict_acc_forward.1} parent=11 // pred_region
          _
        $region16: #{dict_acc_forward.1} parent=11 // pred_fallthru
          _
        // Predicated region
        $region17: #{dict_acc_forward.1} parent=11 // pred_check
          %p541 = pneg %p138
        $region18: #{dict_acc_forward.1} parent=11 // pred_check_branch
          %543 = sbr.rel (%p541) target = $region20
        $region19: #{dict_acc_forward.1} parent=11 // pred_region
          _
        $region20: #{dict_acc_forward.1} parent=11 // pred_fallthru
          _
        // Predicated region
        $region21: #{dict_acc_forward.1} parent=11 // pred_check
          %p544 = pneg %p159
        $region22: #{dict_acc_forward.1} parent=11 // pred_check_branch
          %546 = sbr.rel (%p544) target = $region24
        $region23: #{dict_acc_forward.1} parent=11 // pred_region
          _
        $region24: #{dict_acc_forward.1} parent=11 // pred_fallthru
          _
        // Predicated region
        $region25: #{dict_acc_forward.1} parent=11 // pred_check
          %p547 = pneg %p180
        $region26: #{dict_acc_forward.1} parent=11 // pred_check_branch
          %549 = sbr.rel (%p547) target = $region28
        $region27: #{dict_acc_forward.1} parent=11 // pred_region
          _
        $region28: #{dict_acc_forward.1} parent=11 // pred_fallthru
          _
        // Predicated region
        $region29: #{dict_acc_forward.1} parent=11 // pred_check
          %p550 = pneg %p201
        $region30: #{dict_acc_forward.1} parent=11 // pred_check_branch
          %552 = sbr.rel (%p550) target = $region32
        $region31: #{dict_acc_forward.1} parent=11 // pred_region
          _
        $region32: #{dict_acc_forward.1} parent=11 // pred_fallthru
          _
        // Predicated region
        $region33: #{dict_acc_forward.1} parent=11 // pred_check
          %p553 = pneg %p222
        $region34: #{dict_acc_forward.1} parent=11 // pred_check_branch
          %555 = sbr.rel (%p553) target = $region36
        $region35: #{dict_acc_forward.1} parent=11 // pred_region
          _
        $region36: #{dict_acc_forward.1} parent=11 // pred_fallthru
          _
        // Predicated region
        $region37: #{dict_acc_forward.1} parent=11 // pred_check
          %p556 = pneg %p243
        $region38: #{dict_acc_forward.1} parent=11 // pred_check_branch
          %558 = sbr.rel (%p556) target = $region40
        $region39: #{dict_acc_forward.1} parent=11 // pred_region
          _
        $region40: #{dict_acc_forward.1} parent=11 // pred_fallthru
          _
        // Predicated region
        $region41: #{dict_acc_forward.1} parent=11 // pred_check
          %p559 = pneg %p264
        $region42: #{dict_acc_forward.1} parent=11 // pred_check_branch
          %561 = sbr.rel (%p559) target = $region44
        $region43: #{dict_acc_forward.1} parent=11 // pred_region
          _
        $region44: #{dict_acc_forward.1} parent=11 // pred_fallthru
          _
        // Predicated region
        $region45: #{dict_acc_forward.1} parent=11 // pred_check
          %p562 = pneg %p285
        $region46: #{dict_acc_forward.1} parent=11 // pred_check_branch
          %564 = sbr.rel (%p562) target = $region48
        $region47: #{dict_acc_forward.1} parent=11 // pred_region
          _
        $region48: #{dict_acc_forward.1} parent=11 // pred_fallthru
          _
        // Predicated region
        $region49: #{dict_acc_forward.1} parent=11 // pred_check
          %p565 = pneg %p306
        $region50: #{dict_acc_forward.1} parent=11 // pred_check_branch
          %567 = sbr.rel (%p565) target = $region52
        $region51: #{dict_acc_forward.1} parent=11 // pred_region
          _
        $region52: #{dict_acc_forward.1} parent=11 // pred_fallthru
          _
        // Predicated region
        $region53: #{dict_acc_forward.1} parent=11 // pred_check
          %p568 = pneg %p327
        $region54: #{dict_acc_forward.1} parent=11 // pred_check_branch
          %570 = sbr.rel (%p568) target = $region56
        $region55: #{dict_acc_forward.1} parent=11 // pred_region
          _
        $region56: #{dict_acc_forward.1} parent=11 // pred_fallthru
          _
        // Predicated region
        $region57: #{dict_acc_forward.1} parent=11 // pred_check
          %p571 = pneg %p348
        $region58: #{dict_acc_forward.1} parent=11 // pred_check_branch
          %573 = sbr.rel (%p571) target = $region60
        $region59: #{dict_acc_forward.1} parent=11 // pred_region
          _
        $region60: #{dict_acc_forward.1} parent=11 // pred_fallthru
          _
        // Predicated region
        $region61: #{dict_acc_forward.1} parent=11 // pred_check
          %p574 = pneg %p369
        $region62: #{dict_acc_forward.1} parent=11 // pred_check_branch
          %576 = sbr.rel (%p574) target = $region64
        $region63: #{dict_acc_forward.1} parent=11 // pred_region
          _
        $region64: #{dict_acc_forward.1} parent=11 // pred_fallthru
          _
        // Predicated region
        $region65: #{dict_acc_forward.1} parent=11 // pred_check
          %p577 = pneg %p390
        $region66: #{dict_acc_forward.1} parent=11 // pred_check_branch
          %579 = sbr.rel (%p577) target = $region68
        $region67: #{dict_acc_forward.1} parent=11 // pred_region
          _
        $region68: #{dict_acc_forward.1} parent=11 // pred_fallthru
          _
        // Predicated region
        $region69: #{dict_acc_forward.1} parent=11 // pred_check
          %p580 = pneg %p411
        $region70: #{dict_acc_forward.1} parent=11 // pred_check_branch
          %582 = sbr.rel (%p580) target = $region72
        $region71: #{dict_acc_forward.1} parent=11 // pred_region
          _
        $region72: #{dict_acc_forward.1} parent=11 // pred_fallthru
          _
        // Predicated region
        $region73: #{dict_acc_forward.1} parent=11 // pred_check
          %p583 = pneg %p432
        $region74: #{dict_acc_forward.1} parent=11 // pred_check_branch
          %585 = sbr.rel (%p583) target = $region76
        $region75: #{dict_acc_forward.1} parent=11 // pred_region
          _
        $region76: #{dict_acc_forward.1} parent=11 // pred_fallthru
          _
        // Predicated region
        $region77: #{dict_acc_forward.1} parent=11 // pred_check
          %p586 = pneg %p453
        $region78: #{dict_acc_forward.1} parent=11 // pred_check_branch
          %588 = sbr.rel (%p586) target = $region80
        $region79: #{dict_acc_forward.1} parent=11 // pred_region
          _
        $region80: #{dict_acc_forward.1} parent=11 // pred_fallthru
          _
        // Predicated region
        $region81: #{dict_acc_forward.1} parent=11 // pred_check
          %p589 = pneg %p474
        $region82: #{dict_acc_forward.1} parent=11 // pred_check_branch
          %591 = sbr.rel (%p589) target = $region84
        $region83: #{dict_acc_forward.1} parent=11 // pred_region
          _
        $region84: #{dict_acc_forward.1} parent=11 // pred_fallthru
          _
        // Predicated region
        $region85: #{dict_acc_forward.1} parent=11 // pred_check
          %p592 = pneg %p495
        $region86: #{dict_acc_forward.1} parent=11 // pred_check_branch
          %594 = sbr.rel (%p592) target = $region88
        $region87: #{dict_acc_forward.1} parent=11 // pred_region
          _
        $region88: #{dict_acc_forward.1} parent=11 // pred_fallthru
          _
      $region12: #{dict_acc_forward.1} parent=5 // pred_fallthru
        _
      %p595 = scmp.lt.s32.totalorder %s30, 2
      // Predicated region
      $region89: #{dict_acc_forward.1} parent=5 // pred_check
        %p596 = pneg %p595
      $region90: #{dict_acc_forward.1} parent=5 // pred_check_branch
        %598 = sbr.rel (%p596) target = $region92
      $region91: #{dict_acc_forward.1} parent=5 // pred_region
        // Predicated region
        $region93: #{dict_acc_forward.1} parent=91 // pred_check
          %p599 = pneg %p62
        $region94: #{dict_acc_forward.1} parent=91 // pred_check_branch
          %601 = sbr.rel (%p599) target = $region96
        $region95: #{dict_acc_forward.1} parent=91 // pred_region
          %p602 = scmp.lt.s32.totalorder %s37, 1
          %s603 = scalar_select %p602, %s37, 1
          %s604 = smul.addr %s603, 3
          %s605 = smul.addr %s604, 8
          %s606 = scalar_lea.vmem %s0, %s605
        $region96: #{dict_acc_forward.1} parent=91 // pred_fallthru
          _
        // Predicated region
        $region97: #{dict_acc_forward.1} parent=91 // pred_check
          %p607 = pneg %p90
        $region98: #{dict_acc_forward.1} parent=91 // pred_check_branch
          %609 = sbr.rel (%p607) target = $region100
        $region99: #{dict_acc_forward.1} parent=91 // pred_region
          %s610 = sand.u32 %s80, 1
          %s611 = sand.u32 %s80, 1
          %s612 = smul.addr %s611, 8
          %s613 = scalar_lea.vmem [#allocation2], %s612
          %s614 = sadd.s32 %s37, %s38
          %s615 = smul.addr %s614, 4
          %s616 = scalar_lea.vmem %s1, %s615
          // Predicated region
          $region101: #{dict_acc_forward.1} parent=99 // pred_check
            _
          $region102: #{dict_acc_forward.1} parent=99 // pred_check_branch
            %618 = sbr.rel (0) target = $region104
          $region103: #{dict_acc_forward.1} parent=99 // pred_region
            // Predicated region
            $region105: #{dict_acc_forward.1} parent=103 // pred_check
              _
            $region106: #{dict_acc_forward.1} parent=103 // pred_check_branch
              %620 = sbr.rel target = $region108
            $region107: #{dict_acc_forward.1} parent=103 // pred_region
              // Predicated region
              $region120: #{dict_acc_forward.1} parent=107 // pred_check
                _
              $region121: #{dict_acc_forward.1} parent=107 // pred_check_branch
                %638 = sbr.rel (0) target = $region123
              $region122: #{dict_acc_forward.1} parent=107 // pred_region
                loop: start=0, step=1, limit=1
                $region124: #{dict_acc_forward.1} parent=122 // loop_pre_header
                  _
                $region125: #{dict_acc_forward.1} parent=122 // loop_header
                  %s640 = sphi 0, %s644
                  %p641 = scmp.ge.s32.totalorder %s640, 1
                  %s645 = sphi %s616, %s616
                  %s646 = sphi %s613, %s613
                $region126: #{dict_acc_forward.1} parent=122 // loop_header_branch
                  %643 = sbr.rel (%p641) target = $region130
                $region127: #{dict_acc_forward.1} parent=122 // loop_body
                  _
                $region128: #{dict_acc_forward.1} parent=122 // loop_footer
                  %s644 = sadd.s32 1, %s640
                $region129: #{dict_acc_forward.1} parent=122 // loop_footer_branch
                  %639 = sbr.rel target = $region125
                $region130: #{dict_acc_forward.1} parent=122 // loop_exit
                  _
                %s648 = ssub.s32 16, 1
                loop: start=0, step=1, limit=1
                $region131: #{dict_acc_forward.1} parent=122 // loop_pre_header
                  _
                $region132: #{dict_acc_forward.1} parent=122 // loop_header
                  %s650 = sphi 0, %s654
                  %p651 = scmp.ge.s32.totalorder %s650, 1
                  %s655 = sphi %s616, %s616
                  %s656 = sphi %s613, %s613
                $region133: #{dict_acc_forward.1} parent=122 // loop_header_branch
                  %653 = sbr.rel (%p651) target = $region137
                $region134: #{dict_acc_forward.1} parent=122 // loop_body
                  %v657 = vld [vmem:[%s655] sm:%s648]
                  %658 = vst [vmem:[%s656] sm:%s648] %v657
                  %v659 = vld [vmem:[%s655 + $0x8] sm:%s648]
                  %660 = vst [vmem:[%s656 + $0x4] sm:%s648] %v659
                $region135: #{dict_acc_forward.1} parent=122 // loop_footer
                  %s654 = sadd.s32 1, %s650
                $region136: #{dict_acc_forward.1} parent=122 // loop_footer_branch
                  %649 = sbr.rel target = $region132
                $region137: #{dict_acc_forward.1} parent=122 // loop_exit
                  _
              $region123: #{dict_acc_forward.1} parent=107 // pred_fallthru
                _
            $region108: #{dict_acc_forward.1} parent=103 // pred_fallthru
              _
            // Predicated region
            $region109: #{dict_acc_forward.1} parent=103 // pred_check
              _
            $region110: #{dict_acc_forward.1} parent=103 // pred_check_branch
              %622 = sbr.rel (0) target = $region112
            $region111: #{dict_acc_forward.1} parent=103 // pred_region
              %s624 = ssub.s32 16, 1
              loop: start=0, step=1, limit=1
              $region113: #{dict_acc_forward.1} parent=111 // loop_pre_header
                _
              $region114: #{dict_acc_forward.1} parent=111 // loop_header
                %s626 = sphi 0, %s630
                %p627 = scmp.ge.s32.totalorder %s626, 1
                %s631 = sphi %s616, %s616
                %s632 = sphi %s613, %s613
              $region115: #{dict_acc_forward.1} parent=111 // loop_header_branch
                %629 = sbr.rel (%p627) target = $region119
              $region116: #{dict_acc_forward.1} parent=111 // loop_body
                %v633 = vld [vmem:[%s631] sm:%s624]
                %634 = vst [vmem:[%s632] sm:%s624] %v633
                %v635 = vld [vmem:[%s631 + $0x8] sm:%s624]
                %636 = vst [vmem:[%s632 + $0x4] sm:%s624] %v635
              $region117: #{dict_acc_forward.1} parent=111 // loop_footer
                %s630 = sadd.s32 1, %s626
              $region118: #{dict_acc_forward.1} parent=111 // loop_footer_branch
                %625 = sbr.rel target = $region114
              $region119: #{dict_acc_forward.1} parent=111 // loop_exit
                _
            $region112: #{dict_acc_forward.1} parent=103 // pred_fallthru
              _
          $region104: #{dict_acc_forward.1} parent=99 // pred_fallthru
            _
          %661 = vnop
        $region100: #{dict_acc_forward.1} parent=91 // pred_fallthru
          _
      $region92: #{dict_acc_forward.1} parent=5 // pred_fallthru
        _
      %p662 = scmp.le.s32.totalorder 1, %s30
      %p663 = scmp.lt.s32.totalorder %s30, 3
      %p664 = pnand %p662, %p663
      %p665 = pneg %p664
      // Predicated region
      $region138: #{dict_acc_forward.1} parent=5 // pred_check
        _
      $region139: #{dict_acc_forward.1} parent=5 // pred_check_branch
        %667 = sbr.rel (%p664) target = $region141
      $region140: #{dict_acc_forward.1} parent=5 // pred_region
        %s668 = ssub.s32 %s30, 1
        %s669 = sand.u32 %s83, 1
        %s670 = sand.u32 %s83, 1
        %s671 = smul.addr %s670, 8
        %s672 = scalar_lea.vmem [#allocation2], %s671
        // Predicated region
        $region142: #{dict_acc_forward.1} parent=140 // pred_check
          %p673 = pneg %p96
        $region143: #{dict_acc_forward.1} parent=140 // pred_check_branch
          %675 = sbr.rel (%p673) target = $region145
        $region144: #{dict_acc_forward.1} parent=140 // pred_region
          _
        $region145: #{dict_acc_forward.1} parent=140 // pred_fallthru
          _
        %p676 = scmp.lt.s32.totalorder %s39, 1
        %s677 = scalar_select %p676, %s39, 1
        %s678 = smul.addr %s677, 3
        %s679 = smul.addr %s678, 8
        %s680 = scalar_lea.vmem %s0, %s679
        %p681 = pneg %p68
        %p682 = pneg %p65
        %s683 = sand.u32 %s83, 1
        %s684 = sand.u32 %s83, 1
        %s685 = smul.addr %s684, 8
        %s686 = scalar_lea.vmem [#allocation2], %s685
        %p687 = pneg %p96
        %p688 = pneg %p93
        %p689 = pneg %p117
        %p690 = pneg %p114
        %p691 = pneg %p138
        %p692 = pneg %p135
        %p693 = pneg %p159
        %p694 = pneg %p156
        %p695 = pneg %p180
        %p696 = pneg %p177
        %p697 = pneg %p201
        %p698 = pneg %p198
        %p699 = pneg %p222
        %p700 = pneg %p219
        %p701 = pneg %p243
        %p702 = pneg %p240
        %p703 = pneg %p264
        %p704 = pneg %p261
        %p705 = pneg %p285
        %p706 = pneg %p282
        %p707 = pneg %p306
        %p708 = pneg %p303
        %p709 = pneg %p327
        %p710 = pneg %p324
        %p711 = pneg %p348
        %p712 = pneg %p345
        %p713 = pneg %p369
        %p714 = pneg %p366
        %p715 = pneg %p390
        %p716 = pneg %p387
        %p717 = pneg %p411
        %p718 = pneg %p408
        %p719 = pneg %p432
        %p720 = pneg %p429
        %p721 = pneg %p453
        %p722 = pneg %p450
        %p723 = pneg %p474
        %p724 = pneg %p471
        %p725 = pneg %p495
        %p726 = pneg %p492
        %p727 = pneg %p523
        %p728 = pneg %p520
        %s729 = sand.u32 %s510, 1
        %s730 = scalar_lea.sflag [#allocation4], %s729
        %s731 = sand.u32 %s510, 1
        %s732 = smul.addr %s731, 8
        %s733 = scalar_lea.vmem [#allocation3], %s732
        %p734 = scmp.lt.s32.totalorder %s39, 1
        %s735 = scalar_select %p734, %s39, 1
        %s736 = smul.addr %s735, 3
        %s737 = smul.addr %s736, 8
        %s738 = scalar_lea.vmem %s0, %s737
        %s739 = sadd.s32 %s39, %s40
        %s740 = sadd.s32 %s39, %s40
        %v742 = vld [vmem:[%s738] sm:$0xff]
        %v743 = vld [vmem:[%s738 + $0x8] sm:$0xff]
        %v744 = vld [vmem:[%s738 + $0x10] sm:$0xf]
        %v745 = vld [vmem:[%s672] sm:$0xf]
        %v746 = vld [vmem:[%s672 + $0x4] sm:$0xf]
        %v747 = vld [vmem:[%s2] sm:$0xf]
        %v748 = vld [vmem:[%s2 + $0x4] sm:$0xf]
        %v751 = vunpack.c.l.b16 %v747
        %v752 = vunpack.c.l.b16 %v748
        %v753 = vpack.c.b16 %v752, %v751
        %v756 = vunpack.c.l.b16 %v745
        %v757 = vunpack.c.l.b16 %v746
        %v758 = vpack.c.b16 %v757, %v756
        %vm760 = vcmask 130048
        %v762 = vsel %vm760, %v753, 0
        %764 = vmatpush.bf16.msra.mxu0 0
        %765 = vmatpush.bf16.msra.mxu0 0
        %766 = vmatpush.bf16.msra.mxu0 0
        %767 = vmatpush.bf16.msra.mxu0 0
        %768 = vmatpush.bf16.msra.mxu0 0
        %769 = vmatpush.bf16.msra.mxu0 0
        %770 = vmatpush.bf16.msra.mxu0 0
        %771 = vmatpush.bf16.msra.mxu0 %v758
        %772 = vmatmul.bf16.gmra.mxu0 %v762
        %v773 = vpop.f32.mrf.mxu0
        %v774 = vadd.f32 0.0, %v773
        %v775 = vpop.f32.mrf.mxu0
        %v776 = vadd.f32 0.0, %v775
        %777 = vdwg.mxu0
        %v778 = vmul.f32 %v742, 1.442695
        %v779 = vpow.pop %v778
        %v780 = vmul.f32 %v743, 1.442695
        %v781 = vpow.pop %v780
        %v782 = vld [vmem:[%s3] sm:$0xf]
        %v783 = vld [vmem:[%s3 + $0x4] sm:$0xf]
        %v784 = vld [vmem:[%s3 + $0x8] sm:$0xf]
        %v785 = vld [vmem:[%s3 + $0xc] sm:$0xf]
        %v786 = vld [vmem:[%s4] sm:$0xff]
        %v787 = vld [vmem:[%s4 + $0x8] sm:$0xff]
        %v788 = vld [vmem:[%s4 + $0x10] sm:$0xff]
        %v789 = vld [vmem:[%s4 + $0x18] sm:$0xff]
        %791 = vset.pattern.permute.xlu0 0
        %792 = vperm.xlu0 %791, %v779
        %v793 = vpop.permute.xlu0 %792
        %796 = vset.pattern.permute.xlu0 0
        %797 = vperm.xlu0 %796, %v781
        %v798 = vpop.permute.xlu0 %797
        %v800 = vmul.f32 %v774, %v793
        %v801 = vmul.f32 %v776, %v798
        %v802 = vpack.c.bf16 %v801, %v800
        %804 = vset.pattern.permute.xlu0 0
        %805 = vperm.xlu0 %804, %v786
        %v806 = vpop.permute.xlu0 %805
        %809 = vset.pattern.permute.xlu0 0
        %810 = vperm.xlu0 %809, %v787
        %v811 = vpop.permute.xlu0 %810
        %814 = vset.pattern.permute.xlu0 0
        %815 = vperm.xlu0 %814, %v788
        %v816 = vpop.permute.xlu0 %815
        %819 = vset.pattern.permute.xlu0 0
        %820 = vperm.xlu0 %819, %v789
        %v821 = vpop.permute.xlu0 %820
        %v827 = vunpack.c.l.b16 %v782
        %v828 = vunpack.c.l.b16 %v783
        %v829 = vunpack.c.l.b16 %v784
        %v830 = vunpack.c.l.b16 %v785
        %v831 = vpack.c.b16 %v828, %v827
        %v832 = vpack.c.b16 %v830, %v829
        %v834 = vsel %vm760, %v831, 0
        %v837 = vsel %vm760, %v832, 0
        %839 = vmatpush.bf16.msra.mxu0 0
        %840 = vmatpush.bf16.msra.mxu0 0
        %841 = vmatpush.bf16.msra.mxu0 0
        %842 = vmatpush.bf16.msra.mxu0 0
        %843 = vmatpush.bf16.msra.mxu0 0
        %844 = vmatpush.bf16.msra.mxu0 0
        %845 = vmatpush.bf16.msra.mxu0 0
        %846 = vmatpush.bf16.msra.mxu0 %v802
        %847 = vmatmul.bf16.gmra.mxu0 %v834
        %v848 = vpop.f32.mrf.mxu0
        %v849 = vadd.f32 %v806, %v848
        %v850 = vpop.f32.mrf.mxu0
        %v851 = vadd.f32 %v811, %v850
        %852 = vmatmul.bf16.gmra.mxu0 %v837
        %v853 = vpop.f32.mrf.mxu0
        %v854 = vadd.f32 %v816, %v853
        %v855 = vpop.f32.mrf.mxu0
        %v856 = vadd.f32 %v821, %v855
        %857 = vdwg.mxu0
        %v858 = vmax.f32 %v849, 0.0
        %v859 = vmax.f32 %v851, 0.0
        %v860 = vmax.f32 %v854, 0.0
        %v861 = vmax.f32 %v856, 0.0
        %v862 = vpack.c.bf16 %v859, %v858
        %v863 = vpack.c.bf16 %v861, %v860
        %v864 = vld [vmem:[%s5] sm:$0xf]
        %v865 = vld [vmem:[%s5 + $0x4] sm:$0xf]
        %v868 = vunpack.c.l.b16 %v864
        %v869 = vunpack.c.l.b16 %v865
        %v870 = vpack.c.b16 %v869, %v868
        %vm871 = vcmask 261120
        %v873 = vsel %vm871, %v870, 0
        %875 = vmatpush.bf16.msra.mxu0 0
        %876 = vmatpush.bf16.msra.mxu0 0
        %877 = vmatpush.bf16.msra.mxu0 0
        %878 = vmatpush.bf16.msra.mxu0 0
        %879 = vmatpush.bf16.msra.mxu0 0
        %880 = vmatpush.bf16.msra.mxu0 0
        %881 = vmatpush.bf16.msra.mxu0 %v863
        %882 = vmatpush.bf16.msra.mxu0 %v862
        %883 = vmatmul.bf16.gmra.mxu0 %v873
        %v884 = vpop.f32.mrf.mxu0
        %v885 = vadd.f32 0.0, %v884
        %v886 = vpop.f32.mrf.mxu0
        %v887 = vadd.f32 0.0, %v886
        %888 = vdwg.mxu0
        %v889 = vld [vmem:[%s6] sm:$0xf]
        %v890 = vld [vmem:[%s6 + $0x4] sm:$0xf]
        %v891 = vld [vmem:[%s6 + $0x8] sm:$0xf]
        %v892 = vld [vmem:[%s6 + $0xc] sm:$0xf]
        %v893 = vld [vmem:[%s7] sm:$0xff]
        %v894 = vld [vmem:[%s7 + $0x8] sm:$0xff]
        %v895 = vld [vmem:[%s7 + $0x10] sm:$0xff]
        %v896 = vld [vmem:[%s7 + $0x18] sm:$0xff]
        %897 = vset.pattern.permute.xlu0 1
        %898 = vperm.xlu0 %897, %v779
        %v899 = vpop.permute.xlu0 %898
        %901 = vset.pattern.permute.xlu0 1
        %902 = vperm.xlu0 %901, %v781
        %v903 = vpop.permute.xlu0 %902
        %v905 = vmul.f32 %v885, %v899
        %v906 = vmul.f32 %v887, %v903
        %v907 = vpack.c.bf16 %v906, %v905
        %909 = vset.pattern.permute.xlu0 0
        %910 = vperm.xlu0 %909, %v893
        %v911 = vpop.permute.xlu0 %910
        %914 = vset.pattern.permute.xlu0 0
        %915 = vperm.xlu0 %914, %v894
        %v916 = vpop.permute.xlu0 %915
        %919 = vset.pattern.permute.xlu0 0
        %920 = vperm.xlu0 %919, %v895
        %v921 = vpop.permute.xlu0 %920
        %924 = vset.pattern.permute.xlu0 0
        %925 = vperm.xlu0 %924, %v896
        %v926 = vpop.permute.xlu0 %925
        %v932 = vunpack.c.l.b16 %v889
        %v933 = vunpack.c.l.b16 %v890
        %v934 = vunpack.c.l.b16 %v891
        %v935 = vunpack.c.l.b16 %v892
        %v936 = vpack.c.b16 %v933, %v932
        %v937 = vpack.c.b16 %v935, %v934
        %v939 = vsel %vm760, %v936, 0
        %v942 = vsel %vm760, %v937, 0
        %944 = vmatpush.bf16.msra.mxu0 0
        %945 = vmatpush.bf16.msra.mxu0 0
        %946 = vmatpush.bf16.msra.mxu0 0
        %947 = vmatpush.bf16.msra.mxu0 0
        %948 = vmatpush.bf16.msra.mxu0 0
        %949 = vmatpush.bf16.msra.mxu0 0
        %950 = vmatpush.bf16.msra.mxu0 0
        %951 = vmatpush.bf16.msra.mxu0 %v907
        %952 = vmatmul.bf16.gmra.mxu0 %v939
        %v953 = vpop.f32.mrf.mxu0
        %v954 = vadd.f32 %v911, %v953
        %v955 = vpop.f32.mrf.mxu0
        %v956 = vadd.f32 %v916, %v955
        %957 = vmatmul.bf16.gmra.mxu0 %v942
        %v958 = vpop.f32.mrf.mxu0
        %v959 = vadd.f32 %v921, %v958
        %v960 = vpop.f32.mrf.mxu0
        %v961 = vadd.f32 %v926, %v960
        %962 = vdwg.mxu0
        %v963 = vmax.f32 %v954, 0.0
        %v964 = vmax.f32 %v956, 0.0
        %v965 = vmax.f32 %v959, 0.0
        %v966 = vmax.f32 %v961, 0.0
        %v967 = vpack.c.bf16 %v964, %v963
        %v968 = vpack.c.bf16 %v966, %v965
        %v969 = vld [vmem:[%s8] sm:$0xf]
        %v970 = vld [vmem:[%s8 + $0x4] sm:$0xf]
        %v973 = vunpack.c.l.b16 %v969
        %v974 = vunpack.c.l.b16 %v970
        %v975 = vpack.c.b16 %v974, %v973
        %v977 = vsel %vm871, %v975, 0
        %979 = vmatpush.bf16.msra.mxu0 0
        %980 = vmatpush.bf16.msra.mxu0 0
        %981 = vmatpush.bf16.msra.mxu0 0
        %982 = vmatpush.bf16.msra.mxu0 0
        %983 = vmatpush.bf16.msra.mxu0 0
        %984 = vmatpush.bf16.msra.mxu0 0
        %985 = vmatpush.bf16.msra.mxu0 %v968
        %986 = vmatpush.bf16.msra.mxu0 %v967
        %987 = vmatmul.bf16.gmra.mxu0 %v977
        %v988 = vpop.f32.mrf.mxu0
        %v989 = vadd.f32 0.0, %v988
        %v990 = vpop.f32.mrf.mxu0
        %v991 = vadd.f32 0.0, %v990
        %992 = vdwg.mxu0
        %v993 = vld [vmem:[%s9] sm:$0xf]
        %v994 = vld [vmem:[%s9 + $0x4] sm:$0xf]
        %v995 = vld [vmem:[%s9 + $0x8] sm:$0xf]
        %v996 = vld [vmem:[%s9 + $0xc] sm:$0xf]
        %v997 = vld [vmem:[%s10] sm:$0xff]
        %v998 = vld [vmem:[%s10 + $0x8] sm:$0xff]
        %v999 = vld [vmem:[%s10 + $0x10] sm:$0xff]
        %v1000 = vld [vmem:[%s10 + $0x18] sm:$0xff]
        %1001 = vset.pattern.permute.xlu0 2
        %1002 = vperm.xlu0 %1001, %v779
        %v1003 = vpop.permute.xlu0 %1002
        %1005 = vset.pattern.permute.xlu0 2
        %1006 = vperm.xlu0 %1005, %v781
        %v1007 = vpop.permute.xlu0 %1006
        %v1009 = vmul.f32 %v989, %v1003
        %v1010 = vmul.f32 %v991, %v1007
        %v1011 = vpack.c.bf16 %v1010, %v1009
        %1013 = vset.pattern.permute.xlu0 0
        %1014 = vperm.xlu0 %1013, %v997
        %v1015 = vpop.permute.xlu0 %1014
        %1018 = vset.pattern.permute.xlu0 0
        %1019 = vperm.xlu0 %1018, %v998
        %v1020 = vpop.permute.xlu0 %1019
        %1023 = vset.pattern.permute.xlu0 0
        %1024 = vperm.xlu0 %1023, %v999
        %v1025 = vpop.permute.xlu0 %1024
        %1028 = vset.pattern.permute.xlu0 0
        %1029 = vperm.xlu0 %1028, %v1000
        %v1030 = vpop.permute.xlu0 %1029
        %v1036 = vunpack.c.l.b16 %v993
        %v1037 = vunpack.c.l.b16 %v994
        %v1038 = vunpack.c.l.b16 %v995
        %v1039 = vunpack.c.l.b16 %v996
        %v1040 = vpack.c.b16 %v1037, %v1036
        %v1041 = vpack.c.b16 %v1039, %v1038
        %v1043 = vsel %vm760, %v1040, 0
        %v1046 = vsel %vm760, %v1041, 0
        %1048 = vmatpush.bf16.msra.mxu0 0
        %1049 = vmatpush.bf16.msra.mxu0 0
        %1050 = vmatpush.bf16.msra.mxu0 0
        %1051 = vmatpush.bf16.msra.mxu0 0
        %1052 = vmatpush.bf16.msra.mxu0 0
        %1053 = vmatpush.bf16.msra.mxu0 0
        %1054 = vmatpush.bf16.msra.mxu0 0
        %1055 = vmatpush.bf16.msra.mxu0 %v1011
        %1056 = vmatmul.bf16.gmra.mxu0 %v1043
        %v1057 = vpop.f32.mrf.mxu0
        %v1058 = vadd.f32 %v1015, %v1057
        %v1059 = vpop.f32.mrf.mxu0
        %v1060 = vadd.f32 %v1020, %v1059
        %1061 = vmatmul.bf16.gmra.mxu0 %v1046
        %v1062 = vpop.f32.mrf.mxu0
        %v1063 = vadd.f32 %v1025, %v1062
        %v1064 = vpop.f32.mrf.mxu0
        %v1065 = vadd.f32 %v1030, %v1064
        %1066 = vdwg.mxu0
        %v1067 = vmax.f32 %v1058, 0.0
        %v1068 = vmax.f32 %v1060, 0.0
        %v1069 = vmax.f32 %v1063, 0.0
        %v1070 = vmax.f32 %v1065, 0.0
        %v1071 = vpack.c.bf16 %v1068, %v1067
        %v1072 = vpack.c.bf16 %v1070, %v1069
        %v1073 = vld [vmem:[%s11] sm:$0xf]
        %v1074 = vld [vmem:[%s11 + $0x4] sm:$0xf]
        %v1075 = vld [vmem:[%s11 + $0x8] sm:$0x3]
        %v1079 = vunpack.c.l.b16 %v1073
        %v1080 = vunpack.c.l.b16 %v1074
        %v1081 = vunpack.c.l.b16 %v1075
        %v1082 = vpack.c.b16 %v1080, %v1079
        %v1083 = vpack.c.b16 %v1081, %v1081
        %v1085 = vsel %vm871, %v1082, 0
        %v1088 = vsel %vm871, %v1083, 0
        %1090 = vmatpush.bf16.msra.mxu0 0
        %1091 = vmatpush.bf16.msra.mxu0 0
        %1092 = vmatpush.bf16.msra.mxu0 0
        %1093 = vmatpush.bf16.msra.mxu0 0
        %1094 = vmatpush.bf16.msra.mxu0 0
        %1095 = vmatpush.bf16.msra.mxu0 0
        %1096 = vmatpush.bf16.msra.mxu0 %v1072
        %1097 = vmatpush.bf16.msra.mxu0 %v1071
        %1098 = vmatmul.bf16.gmra.mxu0 %v1085
        %v1099 = vpop.f32.mrf.mxu0
        %v1100 = vadd.f32 0.0, %v1099
        %v1101 = vpop.f32.mrf.mxu0
        %v1102 = vadd.f32 0.0, %v1101
        %1103 = vmatmul.bf16.gmra.mxu0 %v1088
        %v1104 = vpop.f32.mrf.mxu0
        %v1105 = vadd.f32 0.0, %v1104
        %v1106 = vpop.f32.mrf.mxu0
        %1107 = vdwg.mxu0
        %v1108 = vmul.f32 %v744, 1.442695
        %v1109 = vpow.pop %v1108
        %v1110 = vld [vmem:[%s12] sm:$0xf]
        %v1111 = vld [vmem:[%s12 + $0x4] sm:$0xf]
        %v1112 = vld [vmem:[%s12 + $0x8] sm:$0xf]
        %v1113 = vld [vmem:[%s12 + $0xc] sm:$0xf]
        %v1114 = vld [vmem:[%s13] sm:$0xff]
        %v1115 = vld [vmem:[%s13 + $0x8] sm:$0xff]
        %v1116 = vld [vmem:[%s13 + $0x10] sm:$0xff]
        %v1117 = vld [vmem:[%s13 + $0x18] sm:$0xff]
        %1118 = vset.pattern.permute.xlu0 3
        %1119 = vperm.xlu0 %1118, %v779
        %v1120 = vpop.permute.xlu0 %1119
        %1122 = vset.pattern.permute.xlu0 3
        %1123 = vperm.xlu0 %1122, %v781
        %v1124 = vpop.permute.xlu0 %1123
        %1127 = vset.pattern.permute.xlu0 3
        %1128 = vperm.xlu0 %1127, %v1109
        %v1129 = vpop.permute.xlu0 %1128
        %v1131 = vmul.f32 %v1100, %v1120
        %v1132 = vmul.f32 %v1102, %v1124
        %v1133 = vmul.f32 %v1105, %v1129
        %v1134 = vpack.c.bf16 %v1132, %v1131
        %v1135 = vpack.c.bf16 %v1133, %v1133
        %1137 = vset.pattern.permute.xlu0 0
        %1138 = vperm.xlu0 %1137, %v1114
        %v1139 = vpop.permute.xlu0 %1138
        %1142 = vset.pattern.permute.xlu0 0
        %1143 = vperm.xlu0 %1142, %v1115
        %v1144 = vpop.permute.xlu0 %1143
        %1147 = vset.pattern.permute.xlu0 0
        %1148 = vperm.xlu0 %1147, %v1116
        %v1149 = vpop.permute.xlu0 %1148
        %1152 = vset.pattern.permute.xlu0 0
        %1153 = vperm.xlu0 %1152, %v1117
        %v1154 = vpop.permute.xlu0 %1153
        %v1160 = vunpack.c.l.b16 %v1110
        %v1161 = vunpack.c.l.b16 %v1111
        %v1162 = vunpack.c.l.b16 %v1112
        %v1163 = vunpack.c.l.b16 %v1113
        %v1164 = vpack.c.b16 %v1161, %v1160
        %v1165 = vpack.c.b16 %v1163, %v1162
        %vm1166 = vcmask 162816
        %v1168 = vsel %vm1166, %v1164, 0
        %v1171 = vsel %vm1166, %v1165, 0
        %vm1173 = vcmask 1041408
        %v1175 = vsel %vm1173, %v1135, 0
        %1177 = vmatpush.bf16.msra.mxu0 0
        %1178 = vmatpush.bf16.msra.mxu0 0
        %1179 = vmatpush.bf16.msra.mxu0 0
        %1180 = vmatpush.bf16.msra.mxu0 0
        %1181 = vmatpush.bf16.msra.mxu0 0
        %1182 = vmatpush.bf16.msra.mxu0 0
        %1183 = vmatpush.bf16.msra.mxu0 %v1175
        %1184 = vmatpush.bf16.msra.mxu0 %v1134
        %1185 = vmatmul.bf16.gmra.mxu0 %v1168
        %v1186 = vpop.f32.mrf.mxu0
        %v1187 = vadd.f32 %v1139, %v1186
        %v1188 = vpop.f32.mrf.mxu0
        %v1189 = vadd.f32 %v1144, %v1188
        %1190 = vmatmul.bf16.gmra.mxu0 %v1171
        %v1191 = vpop.f32.mrf.mxu0
        %v1192 = vadd.f32 %v1149, %v1191
        %v1193 = vpop.f32.mrf.mxu0
        %v1194 = vadd.f32 %v1154, %v1193
        %1195 = vdwg.mxu0
        %v1196 = vmax.f32 %v1187, 0.0
        %v1197 = vmax.f32 %v1189, 0.0
        %v1198 = vmax.f32 %v1192, 0.0
        %v1199 = vmax.f32 %v1194, 0.0
        %v1200 = vpack.c.bf16 %v1197, %v1196
        %v1201 = vpack.c.bf16 %v1199, %v1198
        %v1202 = vld [vmem:[%s14] sm:$0xf]
        %v1203 = vld [vmem:[%s14 + $0x4] sm:$0xf]
        %v1204 = vld [vmem:[%s14 + $0x8] sm:$0x3]
        %v1205 = vld [vmem:[%s15] sm:$0xf]
        %v1206 = vld [vmem:[%s15 + $0x4] sm:$0xf]
        %v1207 = vld [vmem:[%s15 + $0x8] sm:$0x3]
        %v1211 = vunpack.c.l.b16 %v1205
        %v1212 = vunpack.c.l.b16 %v1206
        %v1213 = vunpack.c.l.b16 %v1207
        %v1214 = vpack.c.b16 %v1212, %v1211
        %v1215 = vpack.c.b16 %v1213, %v1213
        %v1217 = vsel %vm760, %v1214, 0
        %v1220 = vsel %vm760, %v1215, 0
        %1222 = vmatpush.bf16.msra.mxu0 0
        %1223 = vmatpush.bf16.msra.mxu0 0
        %1224 = vmatpush.bf16.msra.mxu0 0
        %1225 = vmatpush.bf16.msra.mxu0 0
        %1226 = vmatpush.bf16.msra.mxu0 0
        %1227 = vmatpush.bf16.msra.mxu0 0
        %1228 = vmatpush.bf16.msra.mxu0 0
        %1229 = vmatpush.bf16.msra.mxu0 %v758
        %1230 = vmatmul.bf16.gmra.mxu0 %v1217
        %v1231 = vpop.f32.mrf.mxu0
        %v1232 = vadd.f32 0.0, %v1231
        %v1233 = vpop.f32.mrf.mxu0
        %v1234 = vadd.f32 0.0, %v1233
        %1235 = vmatmul.bf16.gmra.mxu0 %v1220
        %v1236 = vpop.f32.mrf.mxu0
        %v1237 = vadd.f32 0.0, %v1236
        %v1238 = vpop.f32.mrf.mxu0
        %1239 = vdwg.mxu0
        %v1243 = vunpack.c.l.b16 %v1202
        %v1244 = vunpack.c.l.b16 %v1203
        %v1245 = vunpack.c.l.b16 %v1204
        %v1246 = vpack.c.b16 %v1244, %v1243
        %v1247 = vpack.c.b16 %v1245, %v1245
        %v1249 = vsel %vm871, %v1246, 0
        %v1252 = vsel %vm871, %v1247, 0
        %1254 = vmatpush.bf16.msra.mxu0 0
        %1255 = vmatpush.bf16.msra.mxu0 0
        %1256 = vmatpush.bf16.msra.mxu0 0
        %1257 = vmatpush.bf16.msra.mxu0 0
        %1258 = vmatpush.bf16.msra.mxu0 0
        %1259 = vmatpush.bf16.msra.mxu0 0
        %1260 = vmatpush.bf16.msra.mxu0 %v1201
        %1261 = vmatpush.bf16.msra.mxu0 %v1200
        %1262 = vmatmul.bf16.gmra.mxu0 %v1249
        %v1263 = vpop.f32.mrf.mxu0
        %v1264 = vadd.f32 %v1232, %v1263
        %v1265 = vpop.f32.mrf.mxu0
        %v1266 = vadd.f32 %v1234, %v1265
        %1267 = vmatmul.bf16.gmra.mxu0 %v1252
        %v1268 = vpop.f32.mrf.mxu0
        %v1269 = vadd.f32 %v1237, %v1268
        %v1270 = vpop.f32.mrf.mxu0
        %1271 = vdwg.mxu0
        %v1272 = vld [vmem:[%s16] sm:$0xf]
        %v1273 = vld [vmem:[%s16 + $0x4] sm:$0xf]
        %v1274 = vld [vmem:[%s16 + $0x8] sm:$0xf]
        %v1275 = vld [vmem:[%s16 + $0xc] sm:$0xf]
        %v1276 = vld [vmem:[%s17] sm:$0xff]
        %v1277 = vld [vmem:[%s17 + $0x8] sm:$0xff]
        %v1278 = vld [vmem:[%s17 + $0x10] sm:$0xff]
        %v1279 = vld [vmem:[%s17 + $0x18] sm:$0xff]
        %1280 = vset.pattern.permute.xlu0 4
        %1281 = vperm.xlu0 %1280, %v779
        %v1282 = vpop.permute.xlu0 %1281
        %1284 = vset.pattern.permute.xlu0 4
        %1285 = vperm.xlu0 %1284, %v781
        %v1286 = vpop.permute.xlu0 %1285
        %1288 = vset.pattern.permute.xlu0 4
        %1289 = vperm.xlu0 %1288, %v1109
        %v1290 = vpop.permute.xlu0 %1289
        %v1292 = vmul.f32 %v1264, %v1282
        %v1293 = vmul.f32 %v1266, %v1286
        %v1294 = vmul.f32 %v1269, %v1290
        %v1295 = vpack.c.bf16 %v1293, %v1292
        %v1296 = vpack.c.bf16 %v1294, %v1294
        %1298 = vset.pattern.permute.xlu0 0
        %1299 = vperm.xlu0 %1298, %v1276
        %v1300 = vpop.permute.xlu0 %1299
        %1303 = vset.pattern.permute.xlu0 0
        %1304 = vperm.xlu0 %1303, %v1277
        %v1305 = vpop.permute.xlu0 %1304
        %1308 = vset.pattern.permute.xlu0 0
        %1309 = vperm.xlu0 %1308, %v1278
        %v1310 = vpop.permute.xlu0 %1309
        %1313 = vset.pattern.permute.xlu0 0
        %1314 = vperm.xlu0 %1313, %v1279
        %v1315 = vpop.permute.xlu0 %1314
        %v1321 = vunpack.c.l.b16 %v1272
        %v1322 = vunpack.c.l.b16 %v1273
        %v1323 = vunpack.c.l.b16 %v1274
        %v1324 = vunpack.c.l.b16 %v1275
        %v1325 = vpack.c.b16 %v1322, %v1321
        %v1326 = vpack.c.b16 %v1324, %v1323
        %v1328 = vsel %vm1166, %v1325, 0
        %v1331 = vsel %vm1166, %v1326, 0
        %v1334 = vsel %vm1173, %v1296, 0
        %1336 = vmatpush.bf16.msra.mxu0 0
        %1337 = vmatpush.bf16.msra.mxu0 0
        %1338 = vmatpush.bf16.msra.mxu0 0
        %1339 = vmatpush.bf16.msra.mxu0 0
        %1340 = vmatpush.bf16.msra.mxu0 0
        %1341 = vmatpush.bf16.msra.mxu0 0
        %1342 = vmatpush.bf16.msra.mxu0 %v1334
        %1343 = vmatpush.bf16.msra.mxu0 %v1295
        %1344 = vmatmul.bf16.gmra.mxu0 %v1328
        %v1345 = vpop.f32.mrf.mxu0
        %v1346 = vadd.f32 %v1300, %v1345
        %v1347 = vpop.f32.mrf.mxu0
        %v1348 = vadd.f32 %v1305, %v1347
        %1349 = vmatmul.bf16.gmra.mxu0 %v1331
        %v1350 = vpop.f32.mrf.mxu0
        %v1351 = vadd.f32 %v1310, %v1350
        %v1352 = vpop.f32.mrf.mxu0
        %v1353 = vadd.f32 %v1315, %v1352
        %1354 = vdwg.mxu0
        %v1355 = vmax.f32 %v1346, 0.0
        %v1356 = vmax.f32 %v1348, 0.0
        %v1357 = vmax.f32 %v1351, 0.0
        %v1358 = vmax.f32 %v1353, 0.0
        %v1359 = vpack.c.bf16 %v1356, %v1355
        %v1360 = vpack.c.bf16 %v1358, %v1357
        %v1361 = vld [vmem:[%s18] sm:$0xf]
        %v1362 = vld [vmem:[%s18 + $0x4] sm:$0xf]
        %v1363 = vld [vmem:[%s18 + $0x8] sm:$0x3]
        %v1367 = vunpack.c.l.b16 %v1361
        %v1368 = vunpack.c.l.b16 %v1362
        %v1369 = vunpack.c.l.b16 %v1363
        %v1370 = vpack.c.b16 %v1368, %v1367
        %v1371 = vpack.c.b16 %v1369, %v1369
        %v1373 = vsel %vm871, %v1370, 0
        %v1376 = vsel %vm871, %v1371, 0
        %1378 = vmatpush.bf16.msra.mxu0 0
        %1379 = vmatpush.bf16.msra.mxu0 0
        %1380 = vmatpush.bf16.msra.mxu0 0
        %1381 = vmatpush.bf16.msra.mxu0 0
        %1382 = vmatpush.bf16.msra.mxu0 0
        %1383 = vmatpush.bf16.msra.mxu0 0
        %1384 = vmatpush.bf16.msra.mxu0 %v1360
        %1385 = vmatpush.bf16.msra.mxu0 %v1359
        %1386 = vmatmul.bf16.gmra.mxu0 %v1373
        %v1387 = vpop.f32.mrf.mxu0
        %v1388 = vadd.f32 0.0, %v1387
        %v1389 = vpop.f32.mrf.mxu0
        %v1390 = vadd.f32 0.0, %v1389
        %1391 = vmatmul.bf16.gmra.mxu0 %v1376
        %v1392 = vpop.f32.mrf.mxu0
        %v1393 = vadd.f32 0.0, %v1392
        %v1394 = vpop.f32.mrf.mxu0
        %1395 = vdwg.mxu0
        %v1396 = vld [vmem:[%s19] sm:$0xf]
        %v1397 = vld [vmem:[%s20] sm:$0xff]
        %1398 = vset.pattern.permute.xlu0 5
        %1399 = vperm.xlu0 %1398, %v779
        %v1400 = vpop.permute.xlu0 %1399
        %1402 = vset.pattern.permute.xlu0 5
        %1403 = vperm.xlu0 %1402, %v781
        %v1404 = vpop.permute.xlu0 %1403
        %1406 = vset.pattern.permute.xlu0 5
        %1407 = vperm.xlu0 %1406, %v1109
        %v1408 = vpop.permute.xlu0 %1407
        %v1410 = vmul.f32 %v1388, %v1400
        %v1411 = vmul.f32 %v1390, %v1404
        %v1412 = vmul.f32 %v1393, %v1408
        %v1413 = vpack.c.bf16 %v1411, %v1410
        %v1414 = vpack.c.bf16 %v1412, %v1412
        %1416 = vset.pattern.permute.xlu0 0
        %1417 = vperm.xlu0 %1416, %v1397
        %v1418 = vpop.permute.xlu0 %1417
        %v1421 = vsel %vm1166, %v1396, 0
        %v1424 = vsel %vm1173, %v1414, 0
        %1426 = vmatpush.bf16.msra.mxu0 0
        %1427 = vmatpush.bf16.msra.mxu0 0
        %1428 = vmatpush.bf16.msra.mxu0 0
        %1429 = vmatpush.bf16.msra.mxu0 0
        %1430 = vmatpush.bf16.msra.mxu0 0
        %1431 = vmatpush.bf16.msra.mxu0 0
        %1432 = vmatpush.bf16.msra.mxu0 %v1424
        %1433 = vmatpush.bf16.msra.mxu0 %v1413
        %1434 = vmatmul.bf16.gmra.mxu0 %v1421
        %v1435 = vpop.f32.mrf.mxu0
        %v1436 = vadd.f32 %v1418, %v1435
        %v1437 = vpop.f32.mrf.mxu0
        %1438 = vdwg.mxu0
        %v1439 = vtanh.pop %v1436
        %1440 = vst [vmem:[%s733] sm:$0xff] %v1439
        %s1441 = sand.u32 %s510, 1
        %s1442 = scalar_lea.sflag [#allocation4], %s1441
        %s1443 = sand.u32 %s510, 1
        %s1444 = smul.addr %s1443, 8
        %s1445 = scalar_lea.vmem [#allocation3], %s1444
        // Predicated region
        $region146: #{dict_acc_forward.1} parent=140 // pred_check
          %p1446 = pneg %p520
        $region147: #{dict_acc_forward.1} parent=140 // pred_check_branch
          %1448 = sbr.rel (%p1446) target = $region149
        $region148: #{dict_acc_forward.1} parent=140 // pred_region
          %s1449 = sadd.s32 %s39, %s40
          %1451 = vsyncadd %s1442, 0
          %s1452 = smul.addr %s1449, 8
          %s1453 = scalar_lea.hbm %s21, %s1452
          %s1455 = sshll.u32 %s1445, 4
          %s1456 = int_to_ptr.vmem [resolvable:$true] %s1455
          %s1457 = sshll.u32 %s1453, 4
          %s1458 = int_to_ptr.hbm [resolvable:$true] %s1457
          %1460 = dma.vmem_to_hbm [thread:$0]  %s1456, 128, %s1458, %s1442
        $region149: #{dict_acc_forward.1} parent=140 // pred_fallthru
          _
      $region141: #{dict_acc_forward.1} parent=5 // pred_fallthru
        _
      %p1461 = scmp.le.s32.totalorder 2, %s30
      // Predicated region
      $region150: #{dict_acc_forward.1} parent=5 // pred_check
        %p1462 = pneg %p1461
      $region151: #{dict_acc_forward.1} parent=5 // pred_check_branch
        %1464 = sbr.rel (%p1462) target = $region153
      $region152: #{dict_acc_forward.1} parent=5 // pred_region
        %s1465 = ssub.s32 %s30, 2
        // Predicated region
        $region154: #{dict_acc_forward.1} parent=152 // pred_check
          %p1466 = pneg %p526
        $region155: #{dict_acc_forward.1} parent=152 // pred_check_branch
          %1468 = sbr.rel (%p1466) target = $region157
        $region156: #{dict_acc_forward.1} parent=152 // pred_region
          %s1469 = sand.u32 %s511, 1
          %s1470 = scalar_lea.sflag [#allocation4], %s1469
          %s1471 = sand.u32 %s511, 1
          %s1472 = smul.addr %s1471, 8
          %s1473 = scalar_lea.vmem [#allocation3], %s1472
          %1475 = dma.done %s1470, 128
        $region157: #{dict_acc_forward.1} parent=152 // pred_fallthru
          _
      $region153: #{dict_acc_forward.1} parent=5 // pred_fallthru
        _
    $region6: #{dict_acc_forward.1} parent=1 // loop_footer
      %s34 = sadd.s32 1, %s30
    $region7: #{dict_acc_forward.1} parent=1 // loop_footer_branch
      %29 = sbr.rel target = $region3
    $region8: #{dict_acc_forward.1} parent=1 // loop_exit
      _
    %1476 = vsyncpa [#allocation4], 1
    %s1477 = scalar_lea.sflag [#allocation4], 1
    %1478 = vsyncpa %s1477, 1

</llo_original>
